<compile_context>
chip_gen: v7x
topology: tpu7x:2x2x1
jax: 0.10.0
libtpu: 0.0.40
codegen_flags: <defaults>
</compile_context>

<pallas_src>
import functools

import jax
import jax.numpy as jnp
from jax import lax
from jax.experimental import pallas as pl
from jax.experimental.pallas import tpu as pltpu

# ---- small synthetic config ----
HIDDEN = 32
NUM_HEADS = 4
NUM_KV_HEADS = 2                       # multi_query_group_num
HEAD_DIM = HIDDEN // NUM_HEADS         # 8
GROUP = NUM_HEADS // NUM_KV_HEADS      # 2
FFN = 64                               # ffn_hidden_size
SEQ = 8
NUM_LAYERS = 2
EPS = 1e-5
ROPE_BASE = 10000.0
ROTARY_DIM = HEAD_DIM // 2             # interleaved (GPT-J) rotary on half the head
Q_SIZE = NUM_HEADS * HEAD_DIM          # 32
KV_SIZE = NUM_KV_HEADS * HEAD_DIM      # 16
PROJ_OUT = 2 * Q_SIZE + 3 * KV_SIZE    # [q | k | v | q@P | k@P] = 112
SCALE = HEAD_DIM ** -0.5


# ---------------- Pallas kernel (whole transformer stack) ----------------

def _rms(x, w, eps):
    var = jnp.mean(x * x, axis=-1, keepdims=True)
    return x * lax.rsqrt(var + eps) * w


def _glm_stack_kernel(eps,
                      x_ref, cosq_ref, sinq_ref, cosk_ref, sink_ref,
                      ln1_w_ref, w_proj_ref, b_proj_ref,
                      dense_w_ref, ln2_w_ref, w_gu_ref, w2_ref, fln_w_ref,
                      o_ref,
                      resid_ref, ctx_ref):
    f32, bf16 = jnp.float32, jnp.bfloat16
    layer = pl.program_id(0)
    n_layers = pl.num_programs(0)

    # ---- residual carry lives in VMEM scratch across the layer grid ----
    @pl.when(layer == 0)
    def _():
        resid_ref[...] = x_ref[...].astype(f32)

    resid = resid_ref[...]                              # [T, H] f32
    t = resid.shape[0]

    # ---- input RMSNorm ----
    ln1_bf = _rms(resid, ln1_w_ref[...], eps).astype(bf16)

    # ---- ONE fused projection: [q | k | v | q@P | k@P] (+bias) ----
    # (rotary pair-swap permutation P folded into the weights at host prep time)
    proj = (jnp.dot(ln1_bf, w_proj_ref[...], preferred_element_type=f32)
            + b_proj_ref[...])
    q = proj[:, :Q_SIZE]
    k = proj[:, Q_SIZE:Q_SIZE + KV_SIZE]
    v = proj[:, Q_SIZE + KV_SIZE:Q_SIZE + 2 * KV_SIZE]
    q_sw = proj[:, Q_SIZE + 2 * KV_SIZE:2 * Q_SIZE + 2 * KV_SIZE]
    k_sw = proj[:, 2 * Q_SIZE + 2 * KV_SIZE:]

    # ---- interleaved rotary, pure VPU: out = x*cos + swap(x)*sin
    # (attention scale pre-folded into the q tables) ----
    q = q * cosq_ref[...] + q_sw * sinq_ref[...]
    k = k * cosk_ref[...] + k_sw * sink_ref[...]

    # ---- causal GQA attention: GROUP query heads sharing a KV head are
    # stacked along the sublane axis -> one score + one PV matmul per KV head ----
    rowq = lax.broadcasted_iota(jnp.int32, (GROUP * t, t), 0) % t
    colk = lax.broadcasted_iota(jnp.int32, (GROUP * t, t), 1)
    causal = colk <= rowq
    neg = jnp.float32(-1e30)
    for kvh in range(NUM_KV_HEADS):
        k_h = k[:, kvh * HEAD_DIM:(kvh + 1) * HEAD_DIM].astype(bf16)     # [T, D]
        v_h = v[:, kvh * HEAD_DIM:(kvh + 1) * HEAD_DIM].astype(bf16)     # [T, D]
        q_grp = jnp.concatenate(
            [q[:, (kvh * GROUP + g) * HEAD_DIM:(kvh * GROUP + g + 1) * HEAD_DIM]
             for g in range(GROUP)], axis=0).astype(bf16)                # [G*T, D]
        s = lax.dot_general(q_grp, k_h, (((1,), (1,)), ((), ())),
                            preferred_element_type=f32)                 # [G*T, T]
        s = jnp.where(causal, s, neg)
        s = s - jnp.max(s, axis=-1, keepdims=True)
        p = jnp.exp(s)
        inv_l = pl.reciprocal(jnp.sum(p, axis=-1, keepdims=True), approx=True)
        ctx_grp = jnp.dot(p.astype(bf16), v_h,
                          preferred_element_type=f32) * inv_l           # [G*T, D]
        for g in range(GROUP):                 # write in place, lane-dense ctx slab
            h = kvh * GROUP + g
            ctx_ref[:, h * HEAD_DIM:(h + 1) * HEAD_DIM] = \
                ctx_grp[g * t:(g + 1) * t, :]

    # ---- dense projection (RowParallelLinear, no bias) + residual #1 ----
    attn_out = jnp.dot(ctx_ref[...].astype(bf16), dense_w_ref[...],
                       preferred_element_type=f32)
    resid1 = resid + attn_out     # apply_residual_connection_post_layernorm=False

    # ---- post-attention RMSNorm + fused gate/up SwiGLU MLP + residual #2 ----
    ln2_bf = _rms(resid1, ln2_w_ref[...], eps).astype(bf16)
    gu = jnp.dot(ln2_bf, w_gu_ref[...], preferred_element_type=f32)     # [T, 2*FFN]
    gate, up = gu[:, :FFN], gu[:, FFN:]
    act = gate * (1.0 / (1.0 + jnp.exp(-gate))) * up                    # SiluAndMul
    mlp_out = jnp.dot(act.astype(bf16), w2_ref[...], preferred_element_type=f32)

    new_resid = resid1 + mlp_out
    resid_ref[...] = new_resid
    o_ref[...] = new_resid.astype(o_ref.dtype)

    # ---- final RMSNorm fused into the last layer's grid step ----
    @pl.when(layer == n_layers - 1)
    def _():
        o_ref[...] = _rms(new_resid, fln_w_ref[...], eps).astype(o_ref.dtype)


def glm_forward_pallas(stacked, hidden_states, position_ids):
    t, h = hidden_states.shape
    n_layers = stacked["w_proj"].shape[0]
    cos_q, sin_q, cos_k, sin_k = make_rope_tables(position_ids)

    in_specs = [
        pl.BlockSpec((t, h), lambda l: (0, 0)),                        # hidden_states
        pl.BlockSpec((t, Q_SIZE), lambda l: (0, 0)),                   # cos_q
        pl.BlockSpec((t, Q_SIZE), lambda l: (0, 0)),                   # sin_q
        pl.BlockSpec((t, KV_SIZE), lambda l: (0, 0)),                  # cos_k
        pl.BlockSpec((t, KV_SIZE), lambda l: (0, 0)),                  # sin_k
        pl.BlockSpec((None, 1, h), lambda l: (l, 0, 0)),               # ln1_w
        pl.BlockSpec((None, h, PROJ_OUT), lambda l: (l, 0, 0)),        # w_proj
        pl.BlockSpec((None, 1, PROJ_OUT), lambda l: (l, 0, 0)),        # b_proj
        pl.BlockSpec((None, Q_SIZE, h), lambda l: (l, 0, 0)),          # dense_w
        pl.BlockSpec((None, 1, h), lambda l: (l, 0, 0)),               # ln2_w
        pl.BlockSpec((None, h, 2 * FFN), lambda l: (l, 0, 0)),         # w_gu
        pl.BlockSpec((None, FFN, h), lambda l: (l, 0, 0)),             # w2
        pl.BlockSpec((1, h), lambda l: (0, 0)),                        # final_ln_w
    ]
    return pl.pallas_call(
        functools.partial(_glm_stack_kernel, EPS),
        grid=(n_layers,),
        in_specs=in_specs,
        out_specs=pl.BlockSpec((t, h), lambda l: (0, 0)),
        out_shape=jax.ShapeDtypeStruct((t, h), hidden_states.dtype),
        scratch_shapes=[pltpu.VMEM((t, h), jnp.float32),       # residual carry
                        pltpu.VMEM((t, Q_SIZE), jnp.float32)],  # lane-dense ctx
        compiler_params=pltpu.CompilerParams(
            dimension_semantics=("arbitrary",),        # layer axis carries residual
            vmem_limit_bytes=32 * 1024 * 1024),
    )(hidden_states, cos_q, sin_q, cos_k, sin_k,
      stacked["ln1_w"], stacked["w_proj"], stacked["b_proj"],
      stacked["dense_w"], stacked["ln2_w"], stacked["w_gu"], stacked["w2"],
      stacked["final_ln_w"])


glm_forward = jax.jit(glm_forward_pallas)


# ---------------- host-side precompute (rope tables + one-time weight fusion) ----------------

def _head_rope(position_ids):
    """Per-head interleaved (GPT-J) rotary tables, [T, HEAD_DIM] each; sin carries
    the [-s, +s, ...] sign so that rot(x) = x*cos + swap(x)*sin."""
    t = position_ids.shape[0]
    inv_freq = 1.0 / (ROPE_BASE ** (
        jnp.arange(0, ROTARY_DIM, 2, dtype=jnp.float32) / ROTARY_DIM))
    freqs = position_ids.astype(jnp.float32)[:, None] * inv_freq[None, :]
    cos = jnp.repeat(jnp.cos(freqs), 2, axis=-1)
    sin = jnp.repeat(jnp.sin(freqs), 2, axis=-1)
    sign = jnp.tile(jnp.array([-1.0, 1.0], jnp.float32), ROTARY_DIM // 2)
    sin = sin * sign[None, :]
    cos = jnp.concatenate(
        [cos, jnp.ones((t, HEAD_DIM - ROTARY_DIM), jnp.float32)], axis=-1)
    sin = jnp.concatenate(
        [sin, jnp.zeros((t, HEAD_DIM - ROTARY_DIM), jnp.float32)], axis=-1)
    return cos, sin


def make_rope_tables(position_ids):
    cos, sin = _head_rope(position_ids)
    # attention scale folded into the q tables (rotation commutes with scaling)
    cos_q = jnp.tile(cos, (1, NUM_HEADS)) * SCALE
    sin_q = jnp.tile(sin, (1, NUM_HEADS)) * SCALE
    cos_k = jnp.tile(cos, (1, NUM_KV_HEADS))
    sin_k = jnp.tile(sin, (1, NUM_KV_HEADS))
    return cos_q, sin_q, cos_k, sin_k


def _fold_rotary_into_weights(w, b, num_heads):
    """(w @ P, b @ P) for the per-head interleaved pair-swap permutation P
    (pass-through columns -> 0), built by column re-indexing — the [out, out]
    permutation matrix is never materialized."""
    wf, bf = w.astype(jnp.float32), b.astype(jnp.float32)
    swap = jnp.arange(ROTARY_DIM) ^ 1
    w_cols, b_cols = [], []
    for h in range(num_heads):
        base = h * HEAD_DIM
        wp = jnp.zeros((wf.shape[0], HEAD_DIM), jnp.float32)
        wp = wp.at[:, :ROTARY_DIM].set(wf[:, base + swap])
        bp = jnp.zeros((1, HEAD_DIM), jnp.float32)
        bp = bp.at[:, :ROTARY_DIM].set(bf[:, base + swap])
        w_cols.append(wp)
        b_cols.append(bp)
    return jnp.concatenate(w_cols, axis=1), jnp.concatenate(b_cols, axis=1)


def prepare_stacked_params(params):
    """One-time weight fusion + layer stacking for the streamed-weight kernel."""
    w_proj, b_proj, dense_w, ln1_w, ln2_w, w_gu, w2 = ([] for _ in range(7))
    for layer in params["layers"]:
        wq_p, bq_p = _fold_rotary_into_weights(layer["w_q"], layer["b_q"], NUM_HEADS)
        wk_p, bk_p = _fold_rotary_into_weights(layer["w_k"], layer["b_k"], NUM_KV_HEADS)
        w = jnp.concatenate([layer["w_q"].astype(jnp.float32),
                             layer["w_k"].astype(jnp.float32),
                             layer["w_v"].astype(jnp.float32),
                             wq_p, wk_p], axis=1)
        b = jnp.concatenate([layer["b_q"], layer["b_k"], layer["b_v"],
                             bq_p, bk_p], axis=1)
        w_proj.append(w.astype(jnp.bfloat16))
        b_proj.append(b.astype(jnp.float32))
        dense_w.append(layer["dense_w"])
        ln1_w.append(layer["ln1_w"])
        ln2_w.append(layer["ln2_w"])
        w_gu.append(jnp.concatenate([layer["w_gate"], layer["w_up"]], axis=1))
        w2.append(layer["w2"])
    return {
        "w_proj": jnp.stack(w_proj), "b_proj": jnp.stack(b_proj),
        "dense_w": jnp.stack(dense_w), "ln1_w": jnp.stack(ln1_w),
        "ln2_w": jnp.stack(ln2_w), "w_gu": jnp.stack(w_gu), "w2": jnp.stack(w2),
        "final_ln_w": params["final_ln_w"],
    }


def init_params(key):
    s = 0.02
    layers = []
    for lk in jax.random.split(key, NUM_LAYERS):
        ks = jax.random.split(lk, 10)
        layers.append({
            "ln1_w": jnp.ones((1, HIDDEN), jnp.float32),
            "w_q": (s * jax.random.normal(ks[0], (HIDDEN, Q_SIZE))).astype(jnp.bfloat16),
            "b_q": (s * jax.random.normal(ks[1], (1, Q_SIZE))).astype(jnp.float32),
            "w_k": (s * jax.random.normal(ks[2], (HIDDEN, KV_SIZE))).astype(jnp.bfloat16),
            "b_k": (s * jax.random.normal(ks[3], (1, KV_SIZE))).astype(jnp.float32),
            "w_v": (s * jax.random.normal(ks[4], (HIDDEN, KV_SIZE))).astype(jnp.bfloat16),
            "b_v": (s * jax.random.normal(ks[5], (1, KV_SIZE))).astype(jnp.float32),
            "dense_w": (s * jax.random.normal(ks[6], (Q_SIZE, HIDDEN))).astype(jnp.bfloat16),
            "ln2_w": jnp.ones((1, HIDDEN), jnp.float32),
            "w_gate": (s * jax.random.normal(ks[7], (HIDDEN, FFN))).astype(jnp.bfloat16),
            "w_up": (s * jax.random.normal(ks[8], (HIDDEN, FFN))).astype(jnp.bfloat16),
            "w2": (s * jax.random.normal(ks[9], (FFN, HIDDEN))).astype(jnp.bfloat16),
        })
    return {"layers": layers, "final_ln_w": jnp.ones((1, HIDDEN), jnp.float32)}


# ---------------- pure-JAX reference (standard rotary / softmax, f32) ----------------

def _rms_ref(x, w):
    var = jnp.mean(x * x, axis=-1, keepdims=True)
    return x * lax.rsqrt(var + EPS) * w


def _rotary_ref(x, position_ids, num_heads):
    t = x.shape[0]
    inv_freq = 1.0 / (ROPE_BASE ** (
        jnp.arange(0, ROTARY_DIM, 2, dtype=jnp.float32) / ROTARY_DIM))
    freqs = position_ids.astype(jnp.float32)[:, None] * inv_freq[None, :]
    cos, sin = jnp.cos(freqs)[:, None, :], jnp.sin(freqs)[:, None, :]
    xh = x.reshape(t, num_heads, HEAD_DIM)
    rot, keep = xh[..., :ROTARY_DIM], xh[..., ROTARY_DIM:]
    x1, x2 = rot[..., 0::2], rot[..., 1::2]
    o1, o2 = x1 * cos - x2 * sin, x2 * cos + x1 * sin
    rot_out = jnp.stack([o1, o2], axis=-1).reshape(t, num_heads, ROTARY_DIM)
    return jnp.concatenate([rot_out, keep], axis=-1).reshape(t, num_heads * HEAD_DIM)


def glm_reference(params, hidden_states, position_ids):
    x = hidden_states.astype(jnp.float32)
    t = x.shape[0]
    mask = jnp.tril(jnp.ones((t, t), bool))
    for layer in params["layers"]:
        ln1 = _rms_ref(x, layer["ln1_w"])
        q = ln1 @ layer["w_q"].astype(jnp.float32) + layer["b_q"]
        k = ln1 @ layer["w_k"].astype(jnp.float32) + layer["b_k"]
        v = ln1 @ layer["w_v"].astype(jnp.float32) + layer["b_v"]
        q = _rotary_ref(q, position_ids, NUM_HEADS)
        k = _rotary_ref(k, position_ids, NUM_KV_HEADS)
        qh = q.reshape(t, NUM_HEADS, HEAD_DIM)
        kh = jnp.repeat(k.reshape(t, NUM_KV_HEADS, HEAD_DIM), GROUP, axis=1)
        vh = jnp.repeat(v.reshape(t, NUM_KV_HEADS, HEAD_DIM), GROUP, axis=1)
        s = jnp.einsum("qhd,khd->hqk", qh, kh) * SCALE
        s = jnp.where(mask[None], s, -1e30)
        p = jax.nn.softmax(s, axis=-1)
        ctx = jnp.einsum("hqk,khd->qhd", p, vh).reshape(t, Q_SIZE)
        attn_out = ctx @ layer["dense_w"].astype(jnp.float32)
        resid1 = x + attn_out
        ln2 = _rms_ref(resid1, layer["ln2_w"])
        gate = ln2 @ layer["w_gate"].astype(jnp.float32)
        up = ln2 @ layer["w_up"].astype(jnp.float32)
        x = resid1 + (jax.nn.silu(gate) * up) @ layer["w2"].astype(jnp.float32)
    return _rms_ref(x, params["final_ln_w"])


if __name__ == "__main__":
    key = jax.random.PRNGKey(0)
    k_params, k_x = jax.random.split(key)
    params = init_params(k_params)
    stacked = prepare_stacked_params(params)        # one-time host-side weight fusion
    hidden_states = jax.random.normal(k_x, (SEQ, HIDDEN), dtype=jnp.float32)
    position_ids = jnp.arange(SEQ, dtype=jnp.int32)

    out = glm_forward(stacked, hidden_states, position_ids)
    jax.block_until_ready(out)
    assert out.shape == (SEQ, HIDDEN) and out.dtype == jnp.float32
    assert bool(jnp.all(jnp.isfinite(out)))

    ref = glm_reference(params, hidden_states, position_ids)
    max_err = float(jnp.max(jnp.abs(out - ref)))
    # bf16 MXU matmuls + approx-reciprocal softmax vs f32 reference -> loose tol
    assert max_err < 5e-2, f"mismatch vs pure-JAX reference: {max_err}"
    print("KERNEL_OK")
</pallas_src>

<mosaic_0001>
module attributes {stable_mosaic.version = 11 : i64} {
  func.func @_glm_stack_kernel(%arg0: i32, %arg1: memref<8x32xf32, #tpu.memory_space<vmem>>, %arg2: memref<8x32xf32, #tpu.memory_space<vmem>>, %arg3: memref<8x32xf32, #tpu.memory_space<vmem>>, %arg4: memref<8x16xf32, #tpu.memory_space<vmem>>, %arg5: memref<8x16xf32, #tpu.memory_space<vmem>>, %arg6: memref<1x1x32xf32, #tpu.memory_space<vmem>>, %arg7: memref<1x32x112xbf16, #tpu.memory_space<vmem>>, %arg8: memref<1x1x112xf32, #tpu.memory_space<vmem>>, %arg9: memref<1x32x32xbf16, #tpu.memory_space<vmem>>, %arg10: memref<1x1x32xf32, #tpu.memory_space<vmem>>, %arg11: memref<1x32x128xbf16, #tpu.memory_space<vmem>>, %arg12: memref<1x64x32xbf16, #tpu.memory_space<vmem>>, %arg13: memref<1x32xf32, #tpu.memory_space<vmem>>, %arg14: memref<8x32xf32, #tpu.memory_space<vmem>>, %arg15: memref<8x32xf32, #tpu.memory_space<vmem>>, %arg16: memref<8x32xf32, #tpu.memory_space<vmem>>) attributes {dimension_semantics = [#tpu.dimension_semantics<arbitrary>], iteration_bounds = array<i64: 2>, scalar_prefetch = 0 : i64, scratch_operands = 2 : i64, tpu.core_type = #tpu.core_type<tc>, window_params = [{pipeline_mode = #tpu.pipeline_mode<synchronous>, transform_indices = @transform_0, window_bounds = array<i64: 8, 32>}, {pipeline_mode = #tpu.pipeline_mode<synchronous>, transform_indices = @transform_1, window_bounds = array<i64: 8, 32>}, {pipeline_mode = #tpu.pipeline_mode<synchronous>, transform_indices = @transform_2, window_bounds = array<i64: 8, 32>}, {pipeline_mode = #tpu.pipeline_mode<synchronous>, transform_indices = @transform_3, window_bounds = array<i64: 8, 16>}, {pipeline_mode = #tpu.pipeline_mode<synchronous>, transform_indices = @transform_4, window_bounds = array<i64: 8, 16>}, {transform_indices = @transform_5, window_bounds = array<i64: 1, 1, 32>}, {transform_indices = @transform_6, window_bounds = array<i64: 1, 32, 112>}, {transform_indices = @transform_7, window_bounds = array<i64: 1, 1, 112>}, {transform_indices = @transform_8, window_bounds = array<i64: 1, 32, 32>}, {transform_indices = @transform_9, window_bounds = array<i64: 1, 1, 32>}, {transform_indices = @transform_10, window_bounds = array<i64: 1, 32, 128>}, {transform_indices = @transform_11, window_bounds = array<i64: 1, 64, 32>}, {pipeline_mode = #tpu.pipeline_mode<synchronous>, transform_indices = @transform_12, window_bounds = array<i64: 1, 32>}, {pipeline_mode = #tpu.pipeline_mode<synchronous>, transform_indices = @transform_13, window_bounds = array<i64: 8, 32>}]} {
    %c0_i32 = arith.constant 0 : i32
    %0 = arith.cmpi eq, %arg0, %c0_i32 : i32
    %1 = arith.extui %0 : i1 to i32
    %c0_i32_0 = arith.constant 0 : i32
    %2 = arith.cmpi ne, %1, %c0_i32_0 : i32
    scf.if %2 {
      %c0_70 = arith.constant 0 : index
      %c0_71 = arith.constant 0 : index
      %159 = vector.load %arg1[%c0_70, %c0_71] : memref<8x32xf32, #tpu.memory_space<vmem>>, vector<8x32xf32>
      %c0_72 = arith.constant 0 : index
      %c0_73 = arith.constant 0 : index
      %160 = vector.load %arg15[%c0_72, %c0_73] : memref<8x32xf32, #tpu.memory_space<vmem>>, vector<8x32xf32>
      tpu.vector_store %arg15[%c0_72, %c0_73], %159 {strides = array<i32>} : memref<8x32xf32, #tpu.memory_space<vmem>>, vector<8x32xf32>,
    } else {
    }
    %c0 = arith.constant 0 : index
    %c0_1 = arith.constant 0 : index
    %3 = vector.load %arg15[%c0, %c0_1] : memref<8x32xf32, #tpu.memory_space<vmem>>, vector<8x32xf32>
    %c0_2 = arith.constant 0 : index
    %c0_3 = arith.constant 0 : index
    %c0_4 = arith.constant 0 : index
    %4 = vector.load %arg6[%c0_2, %c0_3, %c0_4] : memref<1x1x32xf32, #tpu.memory_space<vmem>>, vector<1x1x32xf32>
    %5 = vector.shape_cast %4 : vector<1x1x32xf32> to vector<1x32xf32>
    %6 = arith.mulf %3, %3 : vector<8x32xf32>
    %cst = arith.constant dense<0.000000e+00> : vector<8xf32>
    %7 = vector.multi_reduction <add>, %6, %cst [1] : vector<8x32xf32> to vector<8xf32>
    %8 = vector.shape_cast %7 : vector<8xf32> to vector<8x1xf32>
    %cst_5 = arith.constant 3.200000e+01 : f32
    %9 = vector.broadcast %cst_5 : f32 to vector<8x1xf32>
    %10 = arith.divf %8, %9 : vector<8x1xf32>
    %cst_6 = arith.constant 9.99999974E-6 : f32
    %11 = vector.broadcast %cst_6 : f32 to vector<8x1xf32>
    %12 = arith.addf %10, %11 : vector<8x1xf32>
    %13 = math.rsqrt %12 : vector<8x1xf32>
    %14 = vector.broadcast %13 : vector<8x1xf32> to vector<8x32xf32>
    %15 = arith.mulf %3, %14 : vector<8x32xf32>
    %16 = vector.broadcast %5 : vector<1x32xf32> to vector<8x32xf32>
    %17 = arith.mulf %15, %16 : vector<8x32xf32>
    %18 = arith.truncf %17 : vector<8x32xf32> to vector<8x32xbf16>
    %c0_7 = arith.constant 0 : index
    %c0_8 = arith.constant 0 : index
    %c0_9 = arith.constant 0 : index
    %19 = vector.load %arg7[%c0_7, %c0_8, %c0_9] : memref<1x32x112xbf16, #tpu.memory_space<vmem>>, vector<1x32x112xbf16>
    %20 = vector.shape_cast %19 : vector<1x32x112xbf16> to vector<32x112xbf16>
    %cst_10 = arith.constant dense<0.000000e+00> : vector<8x112xf32>
    %21 = tpu.matmul %18, %20, %cst_10 {dimension_numbers = #tpu.dot_dimension_numbers<[1], [0], [0], [1], [0, 0, 1, 1], [], []>} : vector<8x32xbf16>, vector<32x112xbf16>, vector<8x112xf32> -> vector<8x112xf32>
    %c0_11 = arith.constant 0 : index
    %c0_12 = arith.constant 0 : index
    %c0_13 = arith.constant 0 : index
    %22 = vector.load %arg8[%c0_11, %c0_12, %c0_13] : memref<1x1x112xf32, #tpu.memory_space<vmem>>, vector<1x1x112xf32>
    %23 = vector.shape_cast %22 : vector<1x1x112xf32> to vector<1x112xf32>
    %24 = vector.broadcast %23 : vector<1x112xf32> to vector<8x112xf32>
    %25 = arith.addf %21, %24 : vector<8x112xf32>
    %26 = vector.extract_strided_slice %25 {offsets = [0, 0], sizes = [8, 32], strides = [1, 1]} : vector<8x112xf32> to vector<8x32xf32>
    %27 = vector.extract_strided_slice %25 {offsets = [0, 32], sizes = [8, 16], strides = [1, 1]} : vector<8x112xf32> to vector<8x16xf32>
    %28 = vector.extract_strided_slice %25 {offsets = [0, 48], sizes = [8, 16], strides = [1, 1]} : vector<8x112xf32> to vector<8x16xf32>
    %29 = vector.extract_strided_slice %25 {offsets = [0, 64], sizes = [8, 32], strides = [1, 1]} : vector<8x112xf32> to vector<8x32xf32>
    %30 = vector.extract_strided_slice %25 {offsets = [0, 96], sizes = [8, 16], strides = [1, 1]} : vector<8x112xf32> to vector<8x16xf32>
    %c0_14 = arith.constant 0 : index
    %c0_15 = arith.constant 0 : index
    %31 = vector.load %arg2[%c0_14, %c0_15] : memref<8x32xf32, #tpu.memory_space<vmem>>, vector<8x32xf32>
    %32 = arith.mulf %26, %31 : vector<8x32xf32>
    %c0_16 = arith.constant 0 : index
    %c0_17 = arith.constant 0 : index
    %33 = vector.load %arg3[%c0_16, %c0_17] : memref<8x32xf32, #tpu.memory_space<vmem>>, vector<8x32xf32>
    %34 = arith.mulf %29, %33 : vector<8x32xf32>
    %35 = arith.addf %32, %34 : vector<8x32xf32>
    %c0_18 = arith.constant 0 : index
    %c0_19 = arith.constant 0 : index
    %36 = vector.load %arg4[%c0_18, %c0_19] : memref<8x16xf32, #tpu.memory_space<vmem>>, vector<8x16xf32>
    %37 = arith.mulf %27, %36 : vector<8x16xf32>
    %c0_20 = arith.constant 0 : index
    %c0_21 = arith.constant 0 : index
    %38 = vector.load %arg5[%c0_20, %c0_21] : memref<8x16xf32, #tpu.memory_space<vmem>>, vector<8x16xf32>
    %39 = arith.mulf %30, %38 : vector<8x16xf32>
    %40 = arith.addf %37, %39 : vector<8x16xf32>
    %41 = tpu.iota {dimensions = array<i32: 0>} : vector<16x8xi32>
    %c8_i32 = arith.constant 8 : i32
    %c0_i32_22 = arith.constant 0 : i32
    %42 = arith.cmpi eq, %c8_i32, %c0_i32_22 : i32
    %c1_i32 = arith.constant 1 : i32
    %43 = arith.select %42, %c1_i32, %c8_i32 : i32
    %44 = vector.broadcast %43 : i32 to vector<16x8xi32>
    %45 = arith.remsi %41, %44 : vector<16x8xi32>
    %c0_i32_23 = arith.constant 0 : i32
    %46 = vector.broadcast %c0_i32_23 : i32 to vector<16x8xi32>
    %47 = arith.cmpi ne, %45, %46 : vector<16x8xi32>
    %c0_i32_24 = arith.constant 0 : i32
    %48 = vector.broadcast %c0_i32_24 : i32 to vector<16x8xi32>
    %49 = arith.cmpi slt, %45, %48 : vector<16x8xi32>
    %c0_i32_25 = arith.constant 0 : i32
    %50 = arith.cmpi slt, %43, %c0_i32_25 : i32
    %51 = vector.broadcast %50 : i1 to vector<16x8xi1>
    %52 = vector.broadcast %51 : vector<16x8xi1> to vector<16x8xi1>
    %53 = arith.xori %49, %52 : vector<16x8xi1>
    %54 = arith.andi %53, %47 : vector<16x8xi1>
    %55 = vector.broadcast %43 : i32 to vector<16x8xi32>
    %56 = arith.addi %45, %55 : vector<16x8xi32>
    %57 = arith.select %54, %56, %45 : vector<16x8xi1>, vector<16x8xi32>
    %58 = tpu.iota {dimensions = array<i32: 1>} : vector<16x8xi32>
    %59 = arith.cmpi sle, %58, %57 : vector<16x8xi32>
    %60 = vector.extract_strided_slice %40 {offsets = [0, 0], sizes = [8, 8], strides = [1, 1]} : vector<8x16xf32> to vector<8x8xf32>
    %61 = arith.truncf %60 : vector<8x8xf32> to vector<8x8xbf16>
    %62 = vector.extract_strided_slice %28 {offsets = [0, 0], sizes = [8, 8], strides = [1, 1]} : vector<8x16xf32> to vector<8x8xf32>
    %63 = arith.truncf %62 : vector<8x8xf32> to vector<8x8xbf16>
    %64 = vector.extract_strided_slice %35 {offsets = [0, 0], sizes = [8, 8], strides = [1, 1]} : vector<8x32xf32> to vector<8x8xf32>
    %65 = vector.extract_strided_slice %35 {offsets = [0, 8], sizes = [8, 8], strides = [1, 1]} : vector<8x32xf32> to vector<8x8xf32>
    %66 = tpu.concatenate %64, %65 in 0 : vector<8x8xf32>, vector<8x8xf32> -> vector<16x8xf32>
    %67 = arith.truncf %66 : vector<16x8xf32> to vector<16x8xbf16>
    %cst_26 = arith.constant dense<0.000000e+00> : vector<16x8xf32>
    %68 = tpu.matmul %67, %61, %cst_26 {dimension_numbers = #tpu.dot_dimension_numbers<[1], [1], [0], [0], [0, 0, 1, 0], [], []>} : vector<16x8xbf16>, vector<8x8xbf16>, vector<16x8xf32> -> vector<16x8xf32>
    %cst_27 = arith.constant -1.000000e+30 : f32
    %69 = vector.broadcast %cst_27 : f32 to vector<16x8xf32>
    %70 = arith.select %59, %68, %69 : vector<16x8xi1>, vector<16x8xf32>
    %cst_28 = arith.constant dense<0xFF800000> : vector<16xf32>
    %71 = vector.multi_reduction <maximumf>, %70, %cst_28 [1] : vector<16x8xf32> to vector<16xf32>
    %72 = vector.shape_cast %71 : vector<16xf32> to vector<16x1xf32>
    %73 = vector.broadcast %72 : vector<16x1xf32> to vector<16x8xf32>
    %74 = arith.subf %70, %73 : vector<16x8xf32>
    %75 = math.exp %74 : vector<16x8xf32>
    %cst_29 = arith.constant dense<0.000000e+00> : vector<16xf32>
    %76 = vector.multi_reduction <add>, %75, %cst_29 [1] : vector<16x8xf32> to vector<16xf32>
    %77 = vector.shape_cast %76 : vector<16xf32> to vector<16x1xf32>
    %78 = tpu.reciprocal %77 {approx = true} : vector<16x1xf32> -> vector<16x1xf32>
    %79 = arith.truncf %75 : vector<16x8xf32> to vector<16x8xbf16>
    %cst_30 = arith.constant dense<0.000000e+00> : vector<16x8xf32>
    %80 = tpu.matmul %79, %63, %cst_30 {dimension_numbers = #tpu.dot_dimension_numbers<[1], [0], [0], [1], [0, 0, 1, 1], [], []>} : vector<16x8xbf16>, vector<8x8xbf16>, vector<16x8xf32> -> vector<16x8xf32>
    %81 = vector.broadcast %78 : vector<16x1xf32> to vector<16x8xf32>
    %82 = arith.mulf %80, %81 : vector<16x8xf32>
    %83 = vector.extract_strided_slice %82 {offsets = [0, 0], sizes = [8, 8], strides = [1, 1]} : vector<16x8xf32> to vector<8x8xf32>
    %c0_31 = arith.constant 0 : index
    %c0_32 = arith.constant 0 : index
    %84 = vector.load %arg16[%c0_31, %c0_32] : memref<8x32xf32, #tpu.memory_space<vmem>>, vector<8x8xf32>
    tpu.vector_store %arg16[%c0_31, %c0_32], %83 {strides = array<i32>} : memref<8x32xf32, #tpu.memory_space<vmem>>, vector<8x8xf32>,
    %85 = vector.extract_strided_slice %82 {offsets = [8, 0], sizes = [8, 8], strides = [1, 1]} : vector<16x8xf32> to vector<8x8xf32>
    %c0_33 = arith.constant 0 : index
    %c8 = arith.constant 8 : index
    %86 = vector.load %arg16[%c0_33, %c8] : memref<8x32xf32, #tpu.memory_space<vmem>>, vector<8x8xf32>
    tpu.vector_store %arg16[%c0_33, %c8], %85 {strides = array<i32>} : memref<8x32xf32, #tpu.memory_space<vmem>>, vector<8x8xf32>,
    %87 = vector.extract_strided_slice %40 {offsets = [0, 8], sizes = [8, 8], strides = [1, 1]} : vector<8x16xf32> to vector<8x8xf32>
    %88 = arith.truncf %87 : vector<8x8xf32> to vector<8x8xbf16>
    %89 = vector.extract_strided_slice %28 {offsets = [0, 8], sizes = [8, 8], strides = [1, 1]} : vector<8x16xf32> to vector<8x8xf32>
    %90 = arith.truncf %89 : vector<8x8xf32> to vector<8x8xbf16>
    %91 = vector.extract_strided_slice %35 {offsets = [0, 16], sizes = [8, 8], strides = [1, 1]} : vector<8x32xf32> to vector<8x8xf32>
    %92 = vector.extract_strided_slice %35 {offsets = [0, 24], sizes = [8, 8], strides = [1, 1]} : vector<8x32xf32> to vector<8x8xf32>
    %93 = tpu.concatenate %91, %92 in 0 : vector<8x8xf32>, vector<8x8xf32> -> vector<16x8xf32>
    %94 = arith.truncf %93 : vector<16x8xf32> to vector<16x8xbf16>
    %cst_34 = arith.constant dense<0.000000e+00> : vector<16x8xf32>
    %95 = tpu.matmul %94, %88, %cst_34 {dimension_numbers = #tpu.dot_dimension_numbers<[1], [1], [0], [0], [0, 0, 1, 0], [], []>} : vector<16x8xbf16>, vector<8x8xbf16>, vector<16x8xf32> -> vector<16x8xf32>
    %cst_35 = arith.constant -1.000000e+30 : f32
    %96 = vector.broadcast %cst_35 : f32 to vector<16x8xf32>
    %97 = arith.select %59, %95, %96 : vector<16x8xi1>, vector<16x8xf32>
    %cst_36 = arith.constant dense<0xFF800000> : vector<16xf32>
    %98 = vector.multi_reduction <maximumf>, %97, %cst_36 [1] : vector<16x8xf32> to vector<16xf32>
    %99 = vector.shape_cast %98 : vector<16xf32> to vector<16x1xf32>
    %100 = vector.broadcast %99 : vector<16x1xf32> to vector<16x8xf32>
    %101 = arith.subf %97, %100 : vector<16x8xf32>
    %102 = math.exp %101 : vector<16x8xf32>
    %cst_37 = arith.constant dense<0.000000e+00> : vector<16xf32>
    %103 = vector.multi_reduction <add>, %102, %cst_37 [1] : vector<16x8xf32> to vector<16xf32>
    %104 = vector.shape_cast %103 : vector<16xf32> to vector<16x1xf32>
    %105 = tpu.reciprocal %104 {approx = true} : vector<16x1xf32> -> vector<16x1xf32>
    %106 = arith.truncf %102 : vector<16x8xf32> to vector<16x8xbf16>
    %cst_38 = arith.constant dense<0.000000e+00> : vector<16x8xf32>
    %107 = tpu.matmul %106, %90, %cst_38 {dimension_numbers = #tpu.dot_dimension_numbers<[1], [0], [0], [1], [0, 0, 1, 1], [], []>} : vector<16x8xbf16>, vector<8x8xbf16>, vector<16x8xf32> -> vector<16x8xf32>
    %108 = vector.broadcast %105 : vector<16x1xf32> to vector<16x8xf32>
    %109 = arith.mulf %107, %108 : vector<16x8xf32>
    %110 = vector.extract_strided_slice %109 {offsets = [0, 0], sizes = [8, 8], strides = [1, 1]} : vector<16x8xf32> to vector<8x8xf32>
    %c0_39 = arith.constant 0 : index
    %c16 = arith.constant 16 : index
    %111 = vector.load %arg16[%c0_39, %c16] : memref<8x32xf32, #tpu.memory_space<vmem>>, vector<8x8xf32>
    tpu.vector_store %arg16[%c0_39, %c16], %110 {strides = array<i32>} : memref<8x32xf32, #tpu.memory_space<vmem>>, vector<8x8xf32>,
    %112 = vector.extract_strided_slice %109 {offsets = [8, 0], sizes = [8, 8], strides = [1, 1]} : vector<16x8xf32> to vector<8x8xf32>
    %c0_40 = arith.constant 0 : index
    %c24 = arith.constant 24 : index
    %113 = vector.load %arg16[%c0_40, %c24] : memref<8x32xf32, #tpu.memory_space<vmem>>, vector<8x8xf32>
    tpu.vector_store %arg16[%c0_40, %c24], %112 {strides = array<i32>} : memref<8x32xf32, #tpu.memory_space<vmem>>, vector<8x8xf32>,
    %c0_41 = arith.constant 0 : index
    %c0_42 = arith.constant 0 : index
    %114 = vector.load %arg16[%c0_41, %c0_42] : memref<8x32xf32, #tpu.memory_space<vmem>>, vector<8x32xf32>
    %115 = arith.truncf %114 : vector<8x32xf32> to vector<8x32xbf16>
    %c0_43 = arith.constant 0 : index
    %c0_44 = arith.constant 0 : index
    %c0_45 = arith.constant 0 : index
    %116 = vector.load %arg9[%c0_43, %c0_44, %c0_45] : memref<1x32x32xbf16, #tpu.memory_space<vmem>>, vector<1x32x32xbf16>
    %117 = vector.shape_cast %116 : vector<1x32x32xbf16> to vector<32x32xbf16>
    %cst_46 = arith.constant dense<0.000000e+00> : vector<8x32xf32>
    %118 = tpu.matmul %115, %117, %cst_46 {dimension_numbers = #tpu.dot_dimension_numbers<[1], [0], [0], [1], [0, 0, 1, 1], [], []>} : vector<8x32xbf16>, vector<32x32xbf16>, vector<8x32xf32> -> vector<8x32xf32>
    %119 = arith.addf %3, %118 : vector<8x32xf32>
    %c0_47 = arith.constant 0 : index
    %c0_48 = arith.constant 0 : index
    %c0_49 = arith.constant 0 : index
    %120 = vector.load %arg10[%c0_47, %c0_48, %c0_49] : memref<1x1x32xf32, #tpu.memory_space<vmem>>, vector<1x1x32xf32>
    %121 = vector.shape_cast %120 : vector<1x1x32xf32> to vector<1x32xf32>
    %122 = arith.mulf %119, %119 : vector<8x32xf32>
    %cst_50 = arith.constant dense<0.000000e+00> : vector<8xf32>
    %123 = vector.multi_reduction <add>, %122, %cst_50 [1] : vector<8x32xf32> to vector<8xf32>
    %124 = vector.shape_cast %123 : vector<8xf32> to vector<8x1xf32>
    %cst_51 = arith.constant 3.200000e+01 : f32
    %125 = vector.broadcast %cst_51 : f32 to vector<8x1xf32>
    %126 = arith.divf %124, %125 : vector<8x1xf32>
    %cst_52 = arith.constant 9.99999974E-6 : f32
    %127 = vector.broadcast %cst_52 : f32 to vector<8x1xf32>
    %128 = arith.addf %126, %127 : vector<8x1xf32>
    %129 = math.rsqrt %128 : vector<8x1xf32>
    %130 = vector.broadcast %129 : vector<8x1xf32> to vector<8x32xf32>
    %131 = arith.mulf %119, %130 : vector<8x32xf32>
    %132 = vector.broadcast %121 : vector<1x32xf32> to vector<8x32xf32>
    %133 = arith.mulf %131, %132 : vector<8x32xf32>
    %134 = arith.truncf %133 : vector<8x32xf32> to vector<8x32xbf16>
    %c0_53 = arith.constant 0 : index
    %c0_54 = arith.constant 0 : index
    %c0_55 = arith.constant 0 : index
    %135 = vector.load %arg11[%c0_53, %c0_54, %c0_55] : memref<1x32x128xbf16, #tpu.memory_space<vmem>>, vector<1x32x128xbf16>
    %136 = vector.shape_cast %135 : vector<1x32x128xbf16> to vector<32x128xbf16>
    %cst_56 = arith.constant dense<0.000000e+00> : vector<8x128xf32>
    %137 = tpu.matmul %134, %136, %cst_56 {dimension_numbers = #tpu.dot_dimension_numbers<[1], [0], [0], [1], [0, 0, 1, 1], [], []>} : vector<8x32xbf16>, vector<32x128xbf16>, vector<8x128xf32> -> vector<8x128xf32>
    %138 = vector.extract_strided_slice %137 {offsets = [0, 0], sizes = [8, 64], strides = [1, 1]} : vector<8x128xf32> to vector<8x64xf32>
    %139 = vector.extract_strided_slice %137 {offsets = [0, 64], sizes = [8, 64], strides = [1, 1]} : vector<8x128xf32> to vector<8x64xf32>
    %cst_57 = arith.constant 0.000000e+00 : f32
    %140 = vector.broadcast %cst_57 : f32 to vector<8x64xf32>
    %141 = arith.subf %140, %138 : vector<8x64xf32>
    %142 = math.exp %141 : vector<8x64xf32>
    %cst_58 = arith.constant 1.000000e+00 : f32
    %143 = vector.broadcast %cst_58 : f32 to vector<8x64xf32>
    %144 = arith.addf %143, %142 : vector<8x64xf32>
    %cst_59 = arith.constant 1.000000e+00 : f32
    %145 = vector.broadcast %cst_59 : f32 to vector<8x64xf32>
    %146 = arith.divf %145, %144 : vector<8x64xf32>
    %147 = arith.mulf %138, %146 : vector<8x64xf32>
    %148 = arith.mulf %147, %139 : vector<8x64xf32>
    %149 = arith.truncf %148 : vector<8x64xf32> to vector<8x64xbf16>
    %c0_60 = arith.constant 0 : index
    %c0_61 = arith.constant 0 : index
    %c0_62 = arith.constant 0 : index
    %150 = vector.load %arg12[%c0_60, %c0_61, %c0_62] : memref<1x64x32xbf16, #tpu.memory_space<vmem>>, vector<1x64x32xbf16>
    %151 = vector.shape_cast %150 : vector<1x64x32xbf16> to vector<64x32xbf16>
    %cst_63 = arith.constant dense<0.000000e+00> : vector<8x32xf32>
    %152 = tpu.matmul %149, %151, %cst_63 {dimension_numbers = #tpu.dot_dimension_numbers<[1], [0], [0], [1], [0, 0, 1, 1], [], []>} : vector<8x64xbf16>, vector<64x32xbf16>, vector<8x32xf32> -> vector<8x32xf32>
    %153 = arith.addf %119, %152 : vector<8x32xf32>
    %c0_64 = arith.constant 0 : index
    %c0_65 = arith.constant 0 : index
    %154 = vector.load %arg15[%c0_64, %c0_65] : memref<8x32xf32, #tpu.memory_space<vmem>>, vector<8x32xf32>
    tpu.vector_store %arg15[%c0_64, %c0_65], %153 {strides = array<i32>} : memref<8x32xf32, #tpu.memory_space<vmem>>, vector<8x32xf32>,
    %c0_66 = arith.constant 0 : index
    %c0_67 = arith.constant 0 : index
    %155 = vector.load %arg14[%c0_66, %c0_67] : memref<8x32xf32, #tpu.memory_space<vmem>>, vector<8x32xf32>
    tpu.vector_store %arg14[%c0_66, %c0_67], %153 {strides = array<i32>} : memref<8x32xf32, #tpu.memory_space<vmem>>, vector<8x32xf32>,
    %c1_i32_68 = arith.constant 1 : i32
    %156 = arith.cmpi eq, %arg0, %c1_i32_68 : i32
    %157 = arith.extui %156 : i1 to i32
    %c0_i32_69 = arith.constant 0 : i32
    %158 = arith.cmpi ne, %157, %c0_i32_69 : i32
    scf.if %158 {
      %c0_70 = arith.constant 0 : index
      %c0_71 = arith.constant 0 : index
      %159 = vector.load %arg13[%c0_70, %c0_71] : memref<1x32xf32, #tpu.memory_space<vmem>>, vector<1x32xf32>
      %160 = arith.mulf %153, %153 : vector<8x32xf32>
      %cst_72 = arith.constant dense<0.000000e+00> : vector<8xf32>
      %161 = vector.multi_reduction <add>, %160, %cst_72 [1] : vector<8x32xf32> to vector<8xf32>
      %162 = vector.shape_cast %161 : vector<8xf32> to vector<8x1xf32>
      %cst_73 = arith.constant 3.200000e+01 : f32
      %163 = vector.broadcast %cst_73 : f32 to vector<8x1xf32>
      %164 = arith.divf %162, %163 : vector<8x1xf32>
      %cst_74 = arith.constant 9.99999974E-6 : f32
      %165 = vector.broadcast %cst_74 : f32 to vector<8x1xf32>
      %166 = arith.addf %164, %165 : vector<8x1xf32>
      %167 = math.rsqrt %166 : vector<8x1xf32>
      %168 = vector.broadcast %167 : vector<8x1xf32> to vector<8x32xf32>
      %169 = arith.mulf %153, %168 : vector<8x32xf32>
      %170 = vector.broadcast %159 : vector<1x32xf32> to vector<8x32xf32>
      %171 = arith.mulf %169, %170 : vector<8x32xf32>
      %c0_75 = arith.constant 0 : index
      %c0_76 = arith.constant 0 : index
      %172 = vector.load %arg14[%c0_75, %c0_76] : memref<8x32xf32, #tpu.memory_space<vmem>>, vector<8x32xf32>
      tpu.vector_store %arg14[%c0_75, %c0_76], %171 {strides = array<i32>} : memref<8x32xf32, #tpu.memory_space<vmem>>, vector<8x32xf32>,
    } else {
    }
    return
  }
  func.func @transform_0(%arg0: i32) -> (i32, i32) {
    %c0_i32 = arith.constant 0 : i32
    %c0_i32_0 = arith.constant 0 : i32
    %c0_i32_1 = arith.constant 0 : i32
    return %c0_i32, %c0_i32_0 : i32, i32
  }
  func.func @transform_1(%arg0: i32) -> (i32, i32) {
    %c0_i32 = arith.constant 0 : i32
    %c0_i32_0 = arith.constant 0 : i32
    %c0_i32_1 = arith.constant 0 : i32
    return %c0_i32, %c0_i32_0 : i32, i32
  }
  func.func @transform_2(%arg0: i32) -> (i32, i32) {
    %c0_i32 = arith.constant 0 : i32
    %c0_i32_0 = arith.constant 0 : i32
    %c0_i32_1 = arith.constant 0 : i32
    return %c0_i32, %c0_i32_0 : i32, i32
  }
  func.func @transform_3(%arg0: i32) -> (i32, i32) {
    %c0_i32 = arith.constant 0 : i32
    %c0_i32_0 = arith.constant 0 : i32
    %c0_i32_1 = arith.constant 0 : i32
    return %c0_i32, %c0_i32_0 : i32, i32
  }
  func.func @transform_4(%arg0: i32) -> (i32, i32) {
    %c0_i32 = arith.constant 0 : i32
    %c0_i32_0 = arith.constant 0 : i32
    %c0_i32_1 = arith.constant 0 : i32
    return %c0_i32, %c0_i32_0 : i32, i32
  }
  func.func @transform_5(%arg0: i32) -> (i32, i32, i32) {
    %c0_i32 = arith.constant 0 : i32
    %c0_i32_0 = arith.constant 0 : i32
    %c0_i32_1 = arith.constant 0 : i32
    return %arg0, %c0_i32, %c0_i32_0 : i32, i32, i32
  }
  func.func @transform_6(%arg0: i32) -> (i32, i32, i32) {
    %c0_i32 = arith.constant 0 : i32
    %c0_i32_0 = arith.constant 0 : i32
    %c0_i32_1 = arith.constant 0 : i32
    return %arg0, %c0_i32, %c0_i32_0 : i32, i32, i32
  }
  func.func @transform_7(%arg0: i32) -> (i32, i32, i32) {
    %c0_i32 = arith.constant 0 : i32
    %c0_i32_0 = arith.constant 0 : i32
    %c0_i32_1 = arith.constant 0 : i32
    return %arg0, %c0_i32, %c0_i32_0 : i32, i32, i32
  }
  func.func @transform_8(%arg0: i32) -> (i32, i32, i32) {
    %c0_i32 = arith.constant 0 : i32
    %c0_i32_0 = arith.constant 0 : i32
    %c0_i32_1 = arith.constant 0 : i32
    return %arg0, %c0_i32, %c0_i32_0 : i32, i32, i32
  }
  func.func @transform_9(%arg0: i32) -> (i32, i32, i32) {
    %c0_i32 = arith.constant 0 : i32
    %c0_i32_0 = arith.constant 0 : i32
    %c0_i32_1 = arith.constant 0 : i32
    return %arg0, %c0_i32, %c0_i32_0 : i32, i32, i32
  }
  func.func @transform_10(%arg0: i32) -> (i32, i32, i32) {
    %c0_i32 = arith.constant 0 : i32
    %c0_i32_0 = arith.constant 0 : i32
    %c0_i32_1 = arith.constant 0 : i32
    return %arg0, %c0_i32, %c0_i32_0 : i32, i32, i32
  }
  func.func @transform_11(%arg0: i32) -> (i32, i32, i32) {
    %c0_i32 = arith.constant 0 : i32
    %c0_i32_0 = arith.constant 0 : i32
    %c0_i32_1 = arith.constant 0 : i32
    return %arg0, %c0_i32, %c0_i32_0 : i32, i32, i32
  }
  func.func @transform_12(%arg0: i32) -> (i32, i32) {
    %c0_i32 = arith.constant 0 : i32
    %c0_i32_0 = arith.constant 0 : i32
    %c0_i32_1 = arith.constant 0 : i32
    return %c0_i32, %c0_i32_0 : i32, i32
  }
  func.func @transform_13(%arg0: i32) -> (i32, i32) {
    %c0_i32 = arith.constant 0 : i32
    %c0_i32_0 = arith.constant 0 : i32
    %c0_i32_1 = arith.constant 0 : i32
    return %c0_i32, %c0_i32_0 : i32, i32
  }
}

</mosaic_0001>

<llo_original>
// kernel: tile.26
$region0: #{tile.26}
  #allocation0 [shape = 's32[1]{0}', space=sflag, size = 0x4, scoped, tag = 'scoped memory for tile.26']
  %s0 = inlined_call_operand.vmem [shape: f32[2], index: 0, kind: input, shape index: {}]
  %s1 = inlined_call_operand.vmem [shape: f32[2,2], index: 1, kind: output, shape index: {}]
  // Predicated region
  $region2: #{tile.26} parent=0 // pred_check
    _
  $region3: #{tile.26} parent=0 // pred_check_branch
    %3 = sbr.rel (0) target = $region5
  $region4: #{tile.26} parent=0 // pred_region
    _
  $region5: #{tile.26} parent=0 // pred_fallthru
    _
  %v4 = vld [vmem:[%s0] ss:$0 sm:$0xff]
  %5 = vst [vmem:[%s1] sm:$0x3] %v4

// kernel: mul.23
$region0: #{mul.23}
  %s0 = inlined_call_operand.vmem [shape: f32[2,2], index: 0, kind: input, shape index: {}]
  %s1 = inlined_call_operand.vmem [shape: f32[4], index: 1, kind: output, shape index: {}]
  $region1: #{mul.23} parent=0
    #allocation0 [shape = 'u8[4096]{0}', space=vmem, size = 0x1000, scoped, tag = 'scoped mem for output reshape']
    #allocation1 [shape = 'u8[4096]{0}', space=vmem, size = 0x1000, scoped, tag = 'scoped mem for input reshape']
    %s3 = sshllo.u32 0, 2
    %v4 = vld [vmem:[%s0] sm:%s3]
    %5 = vst [vmem:[#allocation1] sm:%s3] %v4
    %v6 = vld [vmem:[#allocation1] sm:$0x1]
    %vm7 = vcmask 15360
    %8 = vst.msk [vmem:[#allocation0] sm:$0x1] %vm7, %v6
    %s9 = scalar_lea.vmem [#allocation1], 1
    %v10 = vld [vmem:[%s9] sm:$0x1]
    %11 = vrot.lane.b32.xlu0 %v10, 2
    %v12 = vpop.permute.xlu0 %11
    %vm13 = vcmask 31760
    %14 = vst.msk [vmem:[#allocation0] sm:$0x1] %vm13, %v12
    %s16 = sshllo.u32 0, 1
    %v18 = vld [vmem:[#allocation0] sm:%s16]
    %s19 = sshllo.u32 0, 1
    %20 = vst [vmem:[%s1] sm:%s19] %v18

// kernel: tile.42
$region0: #{tile.42}
  %s0 = inlined_call_operand.vmem [shape: f32[8,2,8], index: 0, kind: input, shape index: {}]
  %s1 = inlined_call_operand.vmem [shape: f32[8,16], index: 1, kind: output, shape index: {}]
  $region1: #{tile.42} parent=0
    #allocation0 [shape = 'u8[32768]{0}', space=vmem, size = 0x8000, scoped, tag = 'scoped mem for input reshape']
    %s3 = sshllo.u32 0, 2
    %s4 = smul.addr 2, 7
    %s5 = scalar_lea.vmem %s0, %s4
    %v6 = vld [vmem:[%s5] sm:%s3]
    %s7 = scalar_lea.vmem [#allocation0], 56
    %8 = vst [vmem:[%s7] sm:%s3] %v6
    %s9 = smul.addr 2, 6
    %s10 = scalar_lea.vmem %s0, %s9
    %v11 = vld [vmem:[%s10] sm:%s3]
    %s12 = scalar_lea.vmem [#allocation0], 48
    %13 = vst [vmem:[%s12] sm:%s3] %v11
    %s14 = smul.addr 2, 5
    %s15 = scalar_lea.vmem %s0, %s14
    %v16 = vld [vmem:[%s15] sm:%s3]
    %s17 = scalar_lea.vmem [#allocation0], 40
    %18 = vst [vmem:[%s17] sm:%s3] %v16
    %s19 = smul.addr 2, 4
    %s20 = scalar_lea.vmem %s0, %s19
    %v21 = vld [vmem:[%s20] sm:%s3]
    %s22 = scalar_lea.vmem [#allocation0], 32
    %23 = vst [vmem:[%s22] sm:%s3] %v21
    %s24 = smul.addr 2, 3
    %s25 = scalar_lea.vmem %s0, %s24
    %v26 = vld [vmem:[%s25] sm:%s3]
    %s27 = scalar_lea.vmem [#allocation0], 24
    %28 = vst [vmem:[%s27] sm:%s3] %v26
    %s29 = smul.addr 2, 2
    %s30 = scalar_lea.vmem %s0, %s29
    %v31 = vld [vmem:[%s30] sm:%s3]
    %s32 = scalar_lea.vmem [#allocation0], 16
    %33 = vst [vmem:[%s32] sm:%s3] %v31
    %s34 = scalar_lea.vmem %s0, 2
    %v35 = vld [vmem:[%s34] sm:%s3]
    %s36 = scalar_lea.vmem [#allocation0], 8
    %37 = vst [vmem:[%s36] sm:%s3] %v35
    %v38 = vld [vmem:[%s0] sm:%s3]
    %39 = vst [vmem:[#allocation0] sm:%s3] %v38
    %v40 = vld [vmem:[#allocation0] ss:$8 sm:$0xf]
    %v41 = vld [vmem:[#allocation0] ss:$8 sm:$0xf0]
    %vm42 = vcmask 1047556
    %v43 = vsel %vm42, %v41, %v40
    %vm44 = vcmask 64512
    %45 = vst.msk [vmem:[%s1] sm:$0xff] %vm44, %v43
    %s46 = scalar_lea.vmem [#allocation0], 1
    %v47 = vld [vmem:[%s46] ss:$8 sm:$0xf]
    %s48 = scalar_lea.vmem [#allocation0], 1
    %v49 = vld [vmem:[%s48] ss:$8 sm:$0xf0]
    %vm50 = vcmask 1047556
    %v51 = vsel %vm50, %v49, %v47
    %52 = vrot.lane.b32.xlu0 %v51, 8
    %v53 = vpop.permute.xlu0 %52
    %vm54 = vcmask 130112
    %55 = vst.msk [vmem:[%s1] sm:$0xff] %vm54, %v53

// kernel: glm_forward_pallas.1
$region0: #{glm_forward_pallas.1}
  #allocation0 [shape = 'u32[]', space=smem, size = 0x4, offset = 0x4, fixed_abs, tag = 'smem constant byte address 0x4 - core index']
  #allocation1 [shape = 'u32[144,128]{1,0:T(1,128)}', space=vmem, size = 0x12000, scoped, tag = 'internal scratch']
  #allocation2 [shape = 'f32[8,32]{1,0:T(8,128)}', space=vmem, size = 0x1000, scoped, tag = 'scratch operand']
  #allocation3 [shape = 'f32[8,32]{1,0:T(8,128)}', space=vmem, size = 0x1000, scoped, tag = 'scratch operand']
  %s0 = inlined_call_operand.vmem [shape: f32[8,32], index: 0, kind: input, shape index: {}]
  %s1 = inlined_call_operand.vmem [shape: f32[8,32], index: 1, kind: input, shape index: {}]
  %s2 = inlined_call_operand.vmem [shape: f32[8,32], index: 2, kind: input, shape index: {}]
  %s3 = inlined_call_operand.vmem [shape: f32[8,16], index: 3, kind: input, shape index: {}]
  %s4 = inlined_call_operand.vmem [shape: f32[8,16], index: 4, kind: input, shape index: {}]
  %s5 = inlined_call_operand.vmem [shape: f32[2,1,32], index: 5, kind: input, shape index: {}]
  %s6 = inlined_call_operand.vmem [shape: bf16[2,32,112], index: 6, kind: input, shape index: {}]
  %s7 = inlined_call_operand.vmem [shape: f32[2,1,112], index: 7, kind: input, shape index: {}]
  %s8 = inlined_call_operand.vmem [shape: bf16[2,32,32], index: 8, kind: input, shape index: {}]
  %s9 = inlined_call_operand.vmem [shape: f32[2,1,32], index: 9, kind: input, shape index: {}]
  %s10 = inlined_call_operand.vmem [shape: bf16[2,32,128], index: 10, kind: input, shape index: {}]
  %s11 = inlined_call_operand.vmem [shape: bf16[2,64,32], index: 11, kind: input, shape index: {}]
  %s12 = inlined_call_operand.vmem [shape: f32[1,32], index: 12, kind: input, shape index: {}]
  %s13 = inlined_call_operand.hbm [shape: f32[8,32], index: 13, kind: output, shape index: {}]
  %s14 = sld [smem:[#allocation0]]
  $region93: #{glm_forward_pallas.1} parent=0
    _
  %s16 = ssub.s32 1, %s14
  %s17 = scalar_select 0, %s16, %s14
  $region1: #{glm_forward_pallas.1} parent=0
    #allocation4 [shape = 'u8[4096]{0}', space=vmem, size = 0x1000, scoped, tag = 'output window, operand 0, single buffered']
    #allocation5 [shape = 's32[2]{0}', space=sflag, size = 0x8, scoped, tag = 'scoped memory for glm_forward_pallas.1']
    %18 = vsyncpa [#allocation5], 0
    loop: start=0, step=1, limit=4
    $region2: #{glm_forward_pallas.1} parent=1 // loop_pre_header
      _
    $region3: #{glm_forward_pallas.1} parent=1 // loop_header
      %s20 = sphi 0, %s24
      %p21 = scmp.ge.s32.totalorder %s20, 4
      %s28 = sphi 0, %s28
      %s30 = sphi 0, %s28
      %s31 = sphi 0, %s30
      %s45 = sphi 0, %s31
      %s49 = sphi 0, %s49
      %s51 = sphi 0, %s49
      %s52 = sphi 0, %s51
      %s66 = sphi 0, %s52
      %s70 = sphi 0, %s70
      %s72 = sphi 0, %s70
      %s73 = sphi 0, %s72
      %s87 = sphi 0, %s73
      %s91 = sphi 0, %s91
      %s93 = sphi 0, %s91
      %s94 = sphi 0, %s93
      %s108 = sphi 0, %s94
      %s112 = sphi 0, %s112
      %s114 = sphi 0, %s112
      %s115 = sphi 0, %s114
      %s129 = sphi 0, %s115
      %s135 = sphi 0, %s137
      %s138 = sphi 0, %s135
      %s139 = sphi 0, %s138
      %s155 = sphi 0, %s139
      %s161 = sphi 0, %s163
      %s164 = sphi 0, %s161
      %s165 = sphi 0, %s164
      %s181 = sphi 0, %s165
      %s187 = sphi 0, %s189
      %s190 = sphi 0, %s187
      %s191 = sphi 0, %s190
      %s207 = sphi 0, %s191
      %s213 = sphi 0, %s215
      %s216 = sphi 0, %s213
      %s217 = sphi 0, %s216
      %s233 = sphi 0, %s217
      %s239 = sphi 0, %s241
      %s242 = sphi 0, %s239
      %s243 = sphi 0, %s242
      %s259 = sphi 0, %s243
      %s265 = sphi 0, %s267
      %s268 = sphi 0, %s265
      %s269 = sphi 0, %s268
      %s285 = sphi 0, %s269
      %s291 = sphi 0, %s293
      %s294 = sphi 0, %s291
      %s295 = sphi 0, %s294
      %s311 = sphi 0, %s295
      %s315 = sphi 0, %s315
      %s317 = sphi 0, %s315
      %s318 = sphi 0, %s317
      %s332 = sphi 0, %s318
      %s336 = sphi 0, %s336
      %s338 = sphi 0, %s336
      %s339 = sphi 0, %s338
      %s353 = sphi 0, %s339
    $region4: #{glm_forward_pallas.1} parent=1 // loop_header_branch
      %23 = sbr.rel (%p21) target = $region8
    $region5: #{glm_forward_pallas.1} parent=1 // loop_body
      %s25 = ssub.s32 %s20, 1
      %s26 = ssub.s32 %s20, 2
      %s27 = sadd.s32 %s20, 1
      %s29 = sadd.s32 %s28, 1
      %p32 = scmp.eq.s32.totalorder %s20, 1
      %p33 = scmp.ne.s32.totalorder %s28, %s30
      %p34 = scmp.eq.s32.totalorder %s20, 0
      %p35 = por %p33, %p34
      %p36 = scmp.ne.s32.totalorder %s28, %s30
      %p37 = scmp.eq.s32.totalorder %s25, 1
      %p38 = por %p36, %p37
      %p39 = scmp.ne.s32.totalorder %s30, %s31
      %p40 = scmp.eq.s32.totalorder %s25, 0
      %p41 = por %p39, %p40
      %p42 = scmp.ne.s32.totalorder %s30, %s31
      %p43 = scmp.eq.s32.totalorder %s26, 1
      %p44 = por %p42, %p43
      %p46 = scmp.ne.s32.totalorder %s31, %s45
      %p47 = scmp.eq.s32.totalorder %s26, 0
      %p48 = por %p46, %p47
      %s50 = sadd.s32 %s49, 1
      %p53 = scmp.eq.s32.totalorder %s20, 1
      %p54 = scmp.ne.s32.totalorder %s49, %s51
      %p55 = scmp.eq.s32.totalorder %s20, 0
      %p56 = por %p54, %p55
      %p57 = scmp.ne.s32.totalorder %s49, %s51
      %p58 = scmp.eq.s32.totalorder %s25, 1
      %p59 = por %p57, %p58
      %p60 = scmp.ne.s32.totalorder %s51, %s52
      %p61 = scmp.eq.s32.totalorder %s25, 0
      %p62 = por %p60, %p61
      %p63 = scmp.ne.s32.totalorder %s51, %s52
      %p64 = scmp.eq.s32.totalorder %s26, 1
      %p65 = por %p63, %p64
      %p67 = scmp.ne.s32.totalorder %s52, %s66
      %p68 = scmp.eq.s32.totalorder %s26, 0
      %p69 = por %p67, %p68
      %s71 = sadd.s32 %s70, 1
      %p74 = scmp.eq.s32.totalorder %s20, 1
      %p75 = scmp.ne.s32.totalorder %s70, %s72
      %p76 = scmp.eq.s32.totalorder %s20, 0
      %p77 = por %p75, %p76
      %p78 = scmp.ne.s32.totalorder %s70, %s72
      %p79 = scmp.eq.s32.totalorder %s25, 1
      %p80 = por %p78, %p79
      %p81 = scmp.ne.s32.totalorder %s72, %s73
      %p82 = scmp.eq.s32.totalorder %s25, 0
      %p83 = por %p81, %p82
      %p84 = scmp.ne.s32.totalorder %s72, %s73
      %p85 = scmp.eq.s32.totalorder %s26, 1
      %p86 = por %p84, %p85
      %p88 = scmp.ne.s32.totalorder %s73, %s87
      %p89 = scmp.eq.s32.totalorder %s26, 0
      %p90 = por %p88, %p89
      %s92 = sadd.s32 %s91, 1
      %p95 = scmp.eq.s32.totalorder %s20, 1
      %p96 = scmp.ne.s32.totalorder %s91, %s93
      %p97 = scmp.eq.s32.totalorder %s20, 0
      %p98 = por %p96, %p97
      %p99 = scmp.ne.s32.totalorder %s91, %s93
      %p100 = scmp.eq.s32.totalorder %s25, 1
      %p101 = por %p99, %p100
      %p102 = scmp.ne.s32.totalorder %s93, %s94
      %p103 = scmp.eq.s32.totalorder %s25, 0
      %p104 = por %p102, %p103
      %p105 = scmp.ne.s32.totalorder %s93, %s94
      %p106 = scmp.eq.s32.totalorder %s26, 1
      %p107 = por %p105, %p106
      %p109 = scmp.ne.s32.totalorder %s94, %s108
      %p110 = scmp.eq.s32.totalorder %s26, 0
      %p111 = por %p109, %p110
      %s113 = sadd.s32 %s112, 1
      %p116 = scmp.eq.s32.totalorder %s20, 1
      %p117 = scmp.ne.s32.totalorder %s112, %s114
      %p118 = scmp.eq.s32.totalorder %s20, 0
      %p119 = por %p117, %p118
      %p120 = scmp.ne.s32.totalorder %s112, %s114
      %p121 = scmp.eq.s32.totalorder %s25, 1
      %p122 = por %p120, %p121
      %p123 = scmp.ne.s32.totalorder %s114, %s115
      %p124 = scmp.eq.s32.totalorder %s25, 0
      %p125 = por %p123, %p124
      %p126 = scmp.ne.s32.totalorder %s114, %s115
      %p127 = scmp.eq.s32.totalorder %s26, 1
      %p128 = por %p126, %p127
      %p130 = scmp.ne.s32.totalorder %s115, %s129
      %p131 = scmp.eq.s32.totalorder %s26, 0
      %p132 = por %p130, %p131
      %s133 = ssub.s32 %s20, %s27
      %p134 = scmp.eq.s32.totalorder %s133, 0
      %s136 = sadd.s32 %s135, 1
      %s137 = scalar_select %p134, %s135, %s136
      %p140 = pneg %p134
      %p141 = scmp.eq.s32.totalorder %s20, 1
      %p142 = por %p140, %p141
      %p143 = scmp.ne.s32.totalorder %s135, %s138
      %p144 = scmp.eq.s32.totalorder %s20, 0
      %p145 = por %p143, %p144
      %p146 = scmp.ne.s32.totalorder %s135, %s138
      %p147 = scmp.eq.s32.totalorder %s25, 1
      %p148 = por %p146, %p147
      %p149 = scmp.ne.s32.totalorder %s138, %s139
      %p150 = scmp.eq.s32.totalorder %s25, 0
      %p151 = por %p149, %p150
      %p152 = scmp.ne.s32.totalorder %s138, %s139
      %p153 = scmp.eq.s32.totalorder %s26, 1
      %p154 = por %p152, %p153
      %p156 = scmp.ne.s32.totalorder %s139, %s155
      %p157 = scmp.eq.s32.totalorder %s26, 0
      %p158 = por %p156, %p157
      %s159 = ssub.s32 %s20, %s27
      %p160 = scmp.eq.s32.totalorder %s159, 0
      %s162 = sadd.s32 %s161, 1
      %s163 = scalar_select %p160, %s161, %s162
      %p166 = pneg %p160
      %p167 = scmp.eq.s32.totalorder %s20, 1
      %p168 = por %p166, %p167
      %p169 = scmp.ne.s32.totalorder %s161, %s164
      %p170 = scmp.eq.s32.totalorder %s20, 0
      %p171 = por %p169, %p170
      %p172 = scmp.ne.s32.totalorder %s161, %s164
      %p173 = scmp.eq.s32.totalorder %s25, 1
      %p174 = por %p172, %p173
      %p175 = scmp.ne.s32.totalorder %s164, %s165
      %p176 = scmp.eq.s32.totalorder %s25, 0
      %p177 = por %p175, %p176
      %p178 = scmp.ne.s32.totalorder %s164, %s165
      %p179 = scmp.eq.s32.totalorder %s26, 1
      %p180 = por %p178, %p179
      %p182 = scmp.ne.s32.totalorder %s165, %s181
      %p183 = scmp.eq.s32.totalorder %s26, 0
      %p184 = por %p182, %p183
      %s185 = ssub.s32 %s20, %s27
      %p186 = scmp.eq.s32.totalorder %s185, 0
      %s188 = sadd.s32 %s187, 1
      %s189 = scalar_select %p186, %s187, %s188
      %p192 = pneg %p186
      %p193 = scmp.eq.s32.totalorder %s20, 1
      %p194 = por %p192, %p193
      %p195 = scmp.ne.s32.totalorder %s187, %s190
      %p196 = scmp.eq.s32.totalorder %s20, 0
      %p197 = por %p195, %p196
      %p198 = scmp.ne.s32.totalorder %s187, %s190
      %p199 = scmp.eq.s32.totalorder %s25, 1
      %p200 = por %p198, %p199
      %p201 = scmp.ne.s32.totalorder %s190, %s191
      %p202 = scmp.eq.s32.totalorder %s25, 0
      %p203 = por %p201, %p202
      %p204 = scmp.ne.s32.totalorder %s190, %s191
      %p205 = scmp.eq.s32.totalorder %s26, 1
      %p206 = por %p204, %p205
      %p208 = scmp.ne.s32.totalorder %s191, %s207
      %p209 = scmp.eq.s32.totalorder %s26, 0
      %p210 = por %p208, %p209
      %s211 = ssub.s32 %s20, %s27
      %p212 = scmp.eq.s32.totalorder %s211, 0
      %s214 = sadd.s32 %s213, 1
      %s215 = scalar_select %p212, %s213, %s214
      %p218 = pneg %p212
      %p219 = scmp.eq.s32.totalorder %s20, 1
      %p220 = por %p218, %p219
      %p221 = scmp.ne.s32.totalorder %s213, %s216
      %p222 = scmp.eq.s32.totalorder %s20, 0
      %p223 = por %p221, %p222
      %p224 = scmp.ne.s32.totalorder %s213, %s216
      %p225 = scmp.eq.s32.totalorder %s25, 1
      %p226 = por %p224, %p225
      %p227 = scmp.ne.s32.totalorder %s216, %s217
      %p228 = scmp.eq.s32.totalorder %s25, 0
      %p229 = por %p227, %p228
      %p230 = scmp.ne.s32.totalorder %s216, %s217
      %p231 = scmp.eq.s32.totalorder %s26, 1
      %p232 = por %p230, %p231
      %p234 = scmp.ne.s32.totalorder %s217, %s233
      %p235 = scmp.eq.s32.totalorder %s26, 0
      %p236 = por %p234, %p235
      %s237 = ssub.s32 %s20, %s27
      %p238 = scmp.eq.s32.totalorder %s237, 0
      %s240 = sadd.s32 %s239, 1
      %s241 = scalar_select %p238, %s239, %s240
      %p244 = pneg %p238
      %p245 = scmp.eq.s32.totalorder %s20, 1
      %p246 = por %p244, %p245
      %p247 = scmp.ne.s32.totalorder %s239, %s242
      %p248 = scmp.eq.s32.totalorder %s20, 0
      %p249 = por %p247, %p248
      %p250 = scmp.ne.s32.totalorder %s239, %s242
      %p251 = scmp.eq.s32.totalorder %s25, 1
      %p252 = por %p250, %p251
      %p253 = scmp.ne.s32.totalorder %s242, %s243
      %p254 = scmp.eq.s32.totalorder %s25, 0
      %p255 = por %p253, %p254
      %p256 = scmp.ne.s32.totalorder %s242, %s243
      %p257 = scmp.eq.s32.totalorder %s26, 1
      %p258 = por %p256, %p257
      %p260 = scmp.ne.s32.totalorder %s243, %s259
      %p261 = scmp.eq.s32.totalorder %s26, 0
      %p262 = por %p260, %p261
      %s263 = ssub.s32 %s20, %s27
      %p264 = scmp.eq.s32.totalorder %s263, 0
      %s266 = sadd.s32 %s265, 1
      %s267 = scalar_select %p264, %s265, %s266
      %p270 = pneg %p264
      %p271 = scmp.eq.s32.totalorder %s20, 1
      %p272 = por %p270, %p271
      %p273 = scmp.ne.s32.totalorder %s265, %s268
      %p274 = scmp.eq.s32.totalorder %s20, 0
      %p275 = por %p273, %p274
      %p276 = scmp.ne.s32.totalorder %s265, %s268
      %p277 = scmp.eq.s32.totalorder %s25, 1
      %p278 = por %p276, %p277
      %p279 = scmp.ne.s32.totalorder %s268, %s269
      %p280 = scmp.eq.s32.totalorder %s25, 0
      %p281 = por %p279, %p280
      %p282 = scmp.ne.s32.totalorder %s268, %s269
      %p283 = scmp.eq.s32.totalorder %s26, 1
      %p284 = por %p282, %p283
      %p286 = scmp.ne.s32.totalorder %s269, %s285
      %p287 = scmp.eq.s32.totalorder %s26, 0
      %p288 = por %p286, %p287
      %s289 = ssub.s32 %s20, %s27
      %p290 = scmp.eq.s32.totalorder %s289, 0
      %s292 = sadd.s32 %s291, 1
      %s293 = scalar_select %p290, %s291, %s292
      %p296 = pneg %p290
      %p297 = scmp.eq.s32.totalorder %s20, 1
      %p298 = por %p296, %p297
      %p299 = scmp.ne.s32.totalorder %s291, %s294
      %p300 = scmp.eq.s32.totalorder %s20, 0
      %p301 = por %p299, %p300
      %p302 = scmp.ne.s32.totalorder %s291, %s294
      %p303 = scmp.eq.s32.totalorder %s25, 1
      %p304 = por %p302, %p303
      %p305 = scmp.ne.s32.totalorder %s294, %s295
      %p306 = scmp.eq.s32.totalorder %s25, 0
      %p307 = por %p305, %p306
      %p308 = scmp.ne.s32.totalorder %s294, %s295
      %p309 = scmp.eq.s32.totalorder %s26, 1
      %p310 = por %p308, %p309
      %p312 = scmp.ne.s32.totalorder %s295, %s311
      %p313 = scmp.eq.s32.totalorder %s26, 0
      %p314 = por %p312, %p313
      %s316 = sadd.s32 %s315, 1
      %p319 = scmp.eq.s32.totalorder %s20, 1
      %p320 = scmp.ne.s32.totalorder %s315, %s317
      %p321 = scmp.eq.s32.totalorder %s20, 0
      %p322 = por %p320, %p321
      %p323 = scmp.ne.s32.totalorder %s315, %s317
      %p324 = scmp.eq.s32.totalorder %s25, 1
      %p325 = por %p323, %p324
      %p326 = scmp.ne.s32.totalorder %s317, %s318
      %p327 = scmp.eq.s32.totalorder %s25, 0
      %p328 = por %p326, %p327
      %p329 = scmp.ne.s32.totalorder %s317, %s318
      %p330 = scmp.eq.s32.totalorder %s26, 1
      %p331 = por %p329, %p330
      %p333 = scmp.ne.s32.totalorder %s318, %s332
      %p334 = scmp.eq.s32.totalorder %s26, 0
      %p335 = por %p333, %p334
      %s337 = sadd.s32 %s336, 1
      %p340 = scmp.eq.s32.totalorder %s20, 1
      %p341 = scmp.ne.s32.totalorder %s336, %s338
      %p342 = scmp.eq.s32.totalorder %s20, 0
      %p343 = por %p341, %p342
      %p344 = scmp.ne.s32.totalorder %s336, %s338
      %p345 = scmp.eq.s32.totalorder %s25, 1
      %p346 = por %p344, %p345
      %p347 = scmp.ne.s32.totalorder %s338, %s339
      %p348 = scmp.eq.s32.totalorder %s25, 0
      %p349 = por %p347, %p348
      %p350 = scmp.ne.s32.totalorder %s338, %s339
      %p351 = scmp.eq.s32.totalorder %s26, 1
      %p352 = por %p350, %p351
      %p354 = scmp.ne.s32.totalorder %s339, %s353
      %p355 = scmp.eq.s32.totalorder %s26, 0
      %p356 = por %p354, %p355
      %p357 = scmp.le.s32.totalorder 1, %s20
      %p358 = scmp.lt.s32.totalorder %s20, 3
      %p359 = pnand %p357, %p358
      %p360 = pneg %p359
      // Predicated region
      $region9: #{glm_forward_pallas.1} parent=5 // pred_check
        _
      $region10: #{glm_forward_pallas.1} parent=5 // pred_check_branch
        %362 = sbr.rel (%p359) target = $region12
      $region11: #{glm_forward_pallas.1} parent=5 // pred_region
        %s363 = ssub.s32 %s20, 1
        // Predicated region
        $region13: #{glm_forward_pallas.1} parent=11 // pred_check
          %p364 = pneg %p41
        $region14: #{glm_forward_pallas.1} parent=11 // pred_check_branch
          %366 = sbr.rel (%p364) target = $region16
        $region15: #{glm_forward_pallas.1} parent=11 // pred_region
          _
        $region16: #{glm_forward_pallas.1} parent=11 // pred_fallthru
          _
        // Predicated region
        $region17: #{glm_forward_pallas.1} parent=11 // pred_check
          %p367 = pneg %p62
        $region18: #{glm_forward_pallas.1} parent=11 // pred_check_branch
          %369 = sbr.rel (%p367) target = $region20
        $region19: #{glm_forward_pallas.1} parent=11 // pred_region
          _
        $region20: #{glm_forward_pallas.1} parent=11 // pred_fallthru
          _
        // Predicated region
        $region21: #{glm_forward_pallas.1} parent=11 // pred_check
          %p370 = pneg %p83
        $region22: #{glm_forward_pallas.1} parent=11 // pred_check_branch
          %372 = sbr.rel (%p370) target = $region24
        $region23: #{glm_forward_pallas.1} parent=11 // pred_region
          _
        $region24: #{glm_forward_pallas.1} parent=11 // pred_fallthru
          _
        // Predicated region
        $region25: #{glm_forward_pallas.1} parent=11 // pred_check
          %p373 = pneg %p104
        $region26: #{glm_forward_pallas.1} parent=11 // pred_check_branch
          %375 = sbr.rel (%p373) target = $region28
        $region27: #{glm_forward_pallas.1} parent=11 // pred_region
          _
        $region28: #{glm_forward_pallas.1} parent=11 // pred_fallthru
          _
        // Predicated region
        $region29: #{glm_forward_pallas.1} parent=11 // pred_check
          %p376 = pneg %p125
        $region30: #{glm_forward_pallas.1} parent=11 // pred_check_branch
          %378 = sbr.rel (%p376) target = $region32
        $region31: #{glm_forward_pallas.1} parent=11 // pred_region
          _
        $region32: #{glm_forward_pallas.1} parent=11 // pred_fallthru
          _
        // Predicated region
        $region33: #{glm_forward_pallas.1} parent=11 // pred_check
          %p379 = pneg %p328
        $region34: #{glm_forward_pallas.1} parent=11 // pred_check_branch
          %381 = sbr.rel (%p379) target = $region36
        $region35: #{glm_forward_pallas.1} parent=11 // pred_region
          _
        $region36: #{glm_forward_pallas.1} parent=11 // pred_fallthru
          _
      $region12: #{glm_forward_pallas.1} parent=5 // pred_fallthru
        _
      %p382 = scmp.lt.s32.totalorder %s20, 2
      // Predicated region
      $region37: #{glm_forward_pallas.1} parent=5 // pred_check
        %p383 = pneg %p382
      $region38: #{glm_forward_pallas.1} parent=5 // pred_check_branch
        %385 = sbr.rel (%p383) target = $region40
      $region39: #{glm_forward_pallas.1} parent=5 // pred_region
        // Predicated region
        $region41: #{glm_forward_pallas.1} parent=39 // pred_check
          %p386 = pneg %p145
        $region42: #{glm_forward_pallas.1} parent=39 // pred_check_branch
          %388 = sbr.rel (%p386) target = $region44
        $region43: #{glm_forward_pallas.1} parent=39 // pred_region
          %p389 = scmp.lt.s32.totalorder %s20, 1
          %s390 = scalar_select %p389, %s20, 1
          %s391 = scalar_lea.vmem %s5, %s390
        $region44: #{glm_forward_pallas.1} parent=39 // pred_fallthru
          _
        // Predicated region
        $region45: #{glm_forward_pallas.1} parent=39 // pred_check
          %p392 = pneg %p171
        $region46: #{glm_forward_pallas.1} parent=39 // pred_check_branch
          %394 = sbr.rel (%p392) target = $region48
        $region47: #{glm_forward_pallas.1} parent=39 // pred_region
          %p395 = scmp.lt.s32.totalorder %s20, 1
          %s396 = scalar_select %p395, %s20, 1
          %s397 = smul.addr %s396, 4
          %s398 = smul.addr %s397, 4
          %s399 = scalar_lea.vmem %s6, %s398
        $region48: #{glm_forward_pallas.1} parent=39 // pred_fallthru
          _
        // Predicated region
        $region49: #{glm_forward_pallas.1} parent=39 // pred_check
          %p400 = pneg %p197
        $region50: #{glm_forward_pallas.1} parent=39 // pred_check_branch
          %402 = sbr.rel (%p400) target = $region52
        $region51: #{glm_forward_pallas.1} parent=39 // pred_region
          %p403 = scmp.lt.s32.totalorder %s20, 1
          %s404 = scalar_select %p403, %s20, 1
          %s405 = scalar_lea.vmem %s7, %s404
        $region52: #{glm_forward_pallas.1} parent=39 // pred_fallthru
          _
        // Predicated region
        $region53: #{glm_forward_pallas.1} parent=39 // pred_check
          %p406 = pneg %p223
        $region54: #{glm_forward_pallas.1} parent=39 // pred_check_branch
          %408 = sbr.rel (%p406) target = $region56
        $region55: #{glm_forward_pallas.1} parent=39 // pred_region
          %p409 = scmp.lt.s32.totalorder %s20, 1
          %s410 = scalar_select %p409, %s20, 1
          %s411 = smul.addr %s410, 4
          %s412 = smul.addr %s411, 4
          %s413 = scalar_lea.vmem %s8, %s412
        $region56: #{glm_forward_pallas.1} parent=39 // pred_fallthru
          _
        // Predicated region
        $region57: #{glm_forward_pallas.1} parent=39 // pred_check
          %p414 = pneg %p249
        $region58: #{glm_forward_pallas.1} parent=39 // pred_check_branch
          %416 = sbr.rel (%p414) target = $region60
        $region59: #{glm_forward_pallas.1} parent=39 // pred_region
          %p417 = scmp.lt.s32.totalorder %s20, 1
          %s418 = scalar_select %p417, %s20, 1
          %s419 = scalar_lea.vmem %s9, %s418
        $region60: #{glm_forward_pallas.1} parent=39 // pred_fallthru
          _
        // Predicated region
        $region61: #{glm_forward_pallas.1} parent=39 // pred_check
          %p420 = pneg %p275
        $region62: #{glm_forward_pallas.1} parent=39 // pred_check_branch
          %422 = sbr.rel (%p420) target = $region64
        $region63: #{glm_forward_pallas.1} parent=39 // pred_region
          %p423 = scmp.lt.s32.totalorder %s20, 1
          %s424 = scalar_select %p423, %s20, 1
          %s425 = smul.addr %s424, 4
          %s426 = smul.addr %s425, 4
          %s427 = scalar_lea.vmem %s10, %s426
        $region64: #{glm_forward_pallas.1} parent=39 // pred_fallthru
          _
        // Predicated region
        $region65: #{glm_forward_pallas.1} parent=39 // pred_check
          %p428 = pneg %p301
        $region66: #{glm_forward_pallas.1} parent=39 // pred_check_branch
          %430 = sbr.rel (%p428) target = $region68
        $region67: #{glm_forward_pallas.1} parent=39 // pred_region
          %p431 = scmp.lt.s32.totalorder %s20, 1
          %s432 = scalar_select %p431, %s20, 1
          %s433 = smul.addr %s432, 8
          %s434 = smul.addr %s433, 4
          %s435 = scalar_lea.vmem %s11, %s434
        $region68: #{glm_forward_pallas.1} parent=39 // pred_fallthru
          _
      $region40: #{glm_forward_pallas.1} parent=5 // pred_fallthru
        _
      %p436 = scmp.le.s32.totalorder 1, %s20
      %p437 = scmp.lt.s32.totalorder %s20, 3
      %p438 = pnand %p436, %p437
      %p439 = pneg %p438
      // Predicated region
      $region69: #{glm_forward_pallas.1} parent=5 // pred_check
        _
      $region70: #{glm_forward_pallas.1} parent=5 // pred_check_branch
        %441 = sbr.rel (%p438) target = $region72
      $region71: #{glm_forward_pallas.1} parent=5 // pred_region
        %s442 = ssub.s32 %s20, 1
        %p443 = pneg %p41
        %p444 = pneg %p38
        %p445 = pneg %p62
        %p446 = pneg %p59
        %p447 = pneg %p83
        %p448 = pneg %p80
        %p449 = pneg %p104
        %p450 = pneg %p101
        %p451 = pneg %p125
        %p452 = pneg %p122
        %p453 = scmp.lt.s32.totalorder %s25, 1
        %s454 = scalar_select %p453, %s25, 1
        %s455 = scalar_lea.vmem %s5, %s454
        %p456 = pneg %p151
        %p457 = pneg %p148
        %p458 = scmp.lt.s32.totalorder %s25, 1
        %s459 = scalar_select %p458, %s25, 1
        %s460 = smul.addr %s459, 4
        %s461 = smul.addr %s460, 4
        %s462 = scalar_lea.vmem %s6, %s461
        %p463 = pneg %p177
        %p464 = pneg %p174
        %p465 = scmp.lt.s32.totalorder %s25, 1
        %s466 = scalar_select %p465, %s25, 1
        %s467 = scalar_lea.vmem %s7, %s466
        %p468 = pneg %p203
        %p469 = pneg %p200
        %p470 = scmp.lt.s32.totalorder %s25, 1
        %s471 = scalar_select %p470, %s25, 1
        %s472 = smul.addr %s471, 4
        %s473 = smul.addr %s472, 4
        %s474 = scalar_lea.vmem %s8, %s473
        %p475 = pneg %p229
        %p476 = pneg %p226
        %p477 = scmp.lt.s32.totalorder %s25, 1
        %s478 = scalar_select %p477, %s25, 1
        %s479 = scalar_lea.vmem %s9, %s478
        %p480 = pneg %p255
        %p481 = pneg %p252
        %p482 = scmp.lt.s32.totalorder %s25, 1
        %s483 = scalar_select %p482, %s25, 1
        %s484 = smul.addr %s483, 4
        %s485 = smul.addr %s484, 4
        %s486 = scalar_lea.vmem %s10, %s485
        %p487 = pneg %p281
        %p488 = pneg %p278
        %p489 = scmp.lt.s32.totalorder %s25, 1
        %s490 = scalar_select %p489, %s25, 1
        %s491 = smul.addr %s490, 8
        %s492 = smul.addr %s491, 4
        %s493 = scalar_lea.vmem %s11, %s492
        %p494 = pneg %p307
        %p495 = pneg %p304
        %p496 = pneg %p328
        %p497 = pneg %p325
        %p498 = pneg %p349
        %p499 = pneg %p346
        %p500 = scmp.lt.s32.totalorder %s25, 1
        %s501 = scalar_select %p500, %s25, 1
        %s502 = scalar_lea.vmem %s5, %s501
        %p503 = scmp.lt.s32.totalorder %s25, 1
        %s504 = scalar_select %p503, %s25, 1
        %s505 = smul.addr %s504, 4
        %s506 = smul.addr %s505, 4
        %s507 = scalar_lea.vmem %s6, %s506
        %p508 = scmp.lt.s32.totalorder %s25, 1
        %s509 = scalar_select %p508, %s25, 1
        %s510 = scalar_lea.vmem %s7, %s509
        %p511 = scmp.lt.s32.totalorder %s25, 1
        %s512 = scalar_select %p511, %s25, 1
        %s513 = smul.addr %s512, 4
        %s514 = smul.addr %s513, 4
        %s515 = scalar_lea.vmem %s8, %s514
        %p516 = scmp.lt.s32.totalorder %s25, 1
        %s517 = scalar_select %p516, %s25, 1
        %s518 = scalar_lea.vmem %s9, %s517
        %p519 = scmp.lt.s32.totalorder %s25, 1
        %s520 = scalar_select %p519, %s25, 1
        %s521 = smul.addr %s520, 4
        %s522 = smul.addr %s521, 4
        %s523 = scalar_lea.vmem %s10, %s522
        %p524 = scmp.lt.s32.totalorder %s25, 1
        %s525 = scalar_select %p524, %s25, 1
        %s526 = smul.addr %s525, 8
        %s527 = smul.addr %s526, 4
        %s528 = scalar_lea.vmem %s11, %s527
        %p530 = scmp.eq.s32.totalorder %s25, 0
        // Predicated region
        $region73: #{glm_forward_pallas.1} parent=71 // pred_check
          %p531 = pneg %p530
        $region74: #{glm_forward_pallas.1} parent=71 // pred_check_branch
          %533 = sbr.rel (%p531) target = $region76
        $region75: #{glm_forward_pallas.1} parent=71 // pred_region
          %v534 = vld [vmem:[%s0] sm:$0xff]
          %vm535 = vcmask 261120
          %536 = vst.msk [vmem:[#allocation2] sm:$0xff] %vm535, %v534
        $region76: #{glm_forward_pallas.1} parent=71 // pred_fallthru
          _
        %v537 = vld [vmem:[#allocation2] sm:$0xff]
        %v538 = vld [vmem:[%s502] sm:$0x1]
        %v539 = vmul.f32 %v537, %v537
        %vm540 = vcmask 261120
        %v541 = vsel %vm540, %v539, 0.0
        %542 = vadd.xlane.f32.xlu0 %v541
        %v543 = vpop.xlane.xlu0 %542
        %v544 = vrcp.pop 32.0
        %v545 = vmul.f32 %v543, %v544
        %v546 = vadd.f32 %v545, 1e-05
        %v547 = vrsqrt.pop %v546
        %v548 = vmul.f32 %v537, %v547
        %v550 = vlaneseq
        %v551 = vshrl.u32 %v550, 7
        %v552 = vsub.s32 0, %v551
        %v553 = vrot.slane %v538, %v552
        %v555 = vmul.f32 %v548, %v553
        %v556 = vpack.c.bf16 %v555, %v555
        %v557 = vld [vmem:[%s507] sm:$0xf]
        %v558 = vld [vmem:[%s507 + $0x4] sm:$0xf]
        %v559 = vld [vmem:[%s507 + $0x8] sm:$0xf]
        %v560 = vld [vmem:[%s507 + $0xc] sm:$0xf]
        %v561 = vld [vmem:[%s510] sm:$0x1]
        %v563 = vlaneseq
        %v564 = vshrl.u32 %v563, 7
        %v565 = vsub.s32 0, %v564
        %v566 = vrot.slane %v561, %v565
        %v572 = vunpack.c.l.b16 %v557
        %v573 = vunpack.c.l.b16 %v558
        %v574 = vunpack.c.l.b16 %v559
        %v575 = vunpack.c.l.b16 %v560
        %v576 = vpack.c.b16 %v573, %v572
        %v577 = vpack.c.b16 %v575, %v574
        %v581 = vsel %vm540, %v556, 0
        %583 = vmatprep.subr.bf16.mxu0 0
        %584 = vmatpush1.bf16.msra.mxu0 %v576
        %585 = vmatprep.subr.bf16.mxu0 0
        %586 = vmatpush1.bf16.msra.mxu0 %v577
        %587 = vmatprep.subr.bf16.mxu0 0
        %588 = vmatpush1.bf16.msra.mxu0 0
        %589 = vmatprep.subr.bf16.mxu0 0
        %590 = vmatpush1.bf16.msra.mxu0 0
        %591 = vmatprep.subr.bf16.mxu0 0
        %592 = vmatpush1.bf16.msra.mxu0 0
        %593 = vmatprep.subr.bf16.mxu0 0
        %594 = vmatpush1.bf16.msra.mxu0 0
        %595 = vmatprep.subr.bf16.mxu0 0
        %596 = vmatpush1.bf16.msra.mxu0 0
        %597 = vmatprep.subr.bf16.mxu0 0
        %598 = vmatpush1.bf16.msra.mxu0 0
        %599 = vmatprep.subr.bf16.mxu0 0
        %600 = vmatpush1.bf16.msra.mxu0 0
        %601 = vmatprep.subr.bf16.mxu0 0
        %602 = vmatpush1.bf16.msra.mxu0 0
        %603 = vmatprep.subr.bf16.mxu0 0
        %604 = vmatpush1.bf16.msra.mxu0 0
        %605 = vmatprep.subr.bf16.mxu0 0
        %606 = vmatpush1.bf16.msra.mxu0 0
        %607 = vmatprep.subr.bf16.mxu0 0
        %608 = vmatpush1.bf16.msra.mxu0 0
        %609 = vmatprep.subr.bf16.mxu0 0
        %610 = vmatpush1.bf16.msra.mxu0 0
        %611 = vmatprep.subr.bf16.mxu0 0
        %612 = vmatpush1.bf16.msra.mxu0 0
        %613 = vmatprep.subr.bf16.mxu0 0
        %614 = vmatpush1.bf16.msra.mxu0 0
        %615 = vmatprep.mubr.bf16.mxu0 0
        %616 = vmatmul.mubr.bf16.gmra.mrb[0].mxu0 %v581
        %v617 = vpop.f32.mrb[0].mxu0
        %v618 = vadd.f32 %v566, %v617
        %v619 = vpop.f32.mrb[0].mxu0
        %v620 = vpop.f32.mrb[0].mxu0
        %v621 = vpop.f32.mrb[0].mxu0
        %622 = vdwg.mxu0
        %v623 = vld [vmem:[%s1] sm:$0xff]
        %v624 = vmul.f32 %v618, %v623
        %v625 = vld [vmem:[%s2] sm:$0xff]
        %627 = vrot.lane.b32.xlu0 %v625, 64
        %v628 = vpop.permute.xlu0 %627
        %v630 = vmul.f32 %v618, %v628
        %632 = vrot.lane.b32.xlu0 %v630, 64
        %v633 = vpop.permute.xlu0 %632
        %v635 = vadd.f32 %v624, %v633
        %v636 = vld [vmem:[%s3] sm:$0xff]
        %638 = vrot.lane.b32.xlu0 %v636, 32
        %v639 = vpop.permute.xlu0 %638
        %v641 = vmul.f32 %v618, %v639
        %v642 = vld [vmem:[%s4] sm:$0xff]
        %644 = vrot.lane.b32.xlu0 %v642, 96
        %v645 = vpop.permute.xlu0 %644
        %v647 = vmul.f32 %v618, %v645
        %649 = vrot.lane.b32.xlu0 %v647, 64
        %v650 = vpop.permute.xlu0 %649
        %v652 = vadd.f32 %v641, %v650
        %v653 = vlaneseq
        %v654 = vshrl.u32 %v653, 7
        %v655 = vadd.s32 %v654, 8
        %vm656 = vcmp.lt.s32.totalorder %v654, 0
        %v657 = vsub.s32 0, %v654
        %v658 = vsel %vm656, %v657, %v654
        %v659 = vshrl.u32 %v658, 3
        %v660 = vand.u32 %v658, 7
        %v661 = vsub.s32 0, %v660
        %v662 = vsel %vm656, %v661, %v660
        %vm663 = vcmp.lt.s32.totalorder %v655, 0
        %v664 = vsub.s32 0, %v655
        %v665 = vsel %vm663, %v664, %v655
        %v666 = vshrl.u32 %v665, 3
        %v667 = vand.u32 %v665, 7
        %v668 = vsub.s32 0, %v667
        %v669 = vsel %vm663, %v668, %v667
        %vm670 = vcmp.ne.s32.totalorder %v662, 0
        %vm671 = vcmp.ne.s32.totalorder %v669, 0
        %vm672 = vcmp.lt.s32.totalorder %v662, 0
        %vm673 = vcmp.lt.s32.totalorder %v669, 0
        %vm674 = vmand %vm672, %vm670
        %vm675 = vmand %vm673, %vm671
        %v676 = vadd.s32 %v662, 8
        %v677 = vadd.s32 %v669, 8
        %v678 = vsel %vm674, %v676, %v662
        %v679 = vsel %vm675, %v677, %v669
        %v680 = vlaneseq
        %v681 = vand.u32 %v680, 127
        %vm682 = vcmp.le.s32.totalorder %v681, %v678
        %vm683 = vcmp.le.s32.totalorder %v681, %v679
        %v684 = vpack.c.bf16 %v652, %v652
        %v685 = vpack.c.bf16 %v618, %v618
        %687 = vrot.lane.b32.xlu0 %v635, 120
        %v688 = vpop.permute.xlu0 %687
        %v690 = vpack.c.bf16 %v688, %v635
        %692 = vrot.lane.b32.xlu0 %v684, 96
        %v693 = vpop.permute.xlu0 %692
        %vm694 = vcmask 64512
        %v696 = vsel %vm694, %v690, 0
        %v699 = vsel %vm694, %v693, 0
        %701 = vmatprep.subr.bf16.mxu0 0
        %702 = vmatpush1.bf16.xpose.msra.mxu0 %v699
        %703 = vmatprep.subr.bf16.mxu0 0
        %704 = vmatpush1.bf16.xpose.msra.mxu0 0
        %705 = vmatprep.subr.bf16.mxu0 0
        %706 = vmatpush1.bf16.xpose.msra.mxu0 0
        %707 = vmatprep.subr.bf16.mxu0 0
        %708 = vmatpush1.bf16.xpose.msra.mxu0 0
        %709 = vmatprep.subr.bf16.mxu0 0
        %710 = vmatpush1.bf16.xpose.msra.mxu0 0
        %711 = vmatprep.subr.bf16.mxu0 0
        %712 = vmatpush1.bf16.xpose.msra.mxu0 0
        %713 = vmatprep.subr.bf16.mxu0 0
        %714 = vmatpush1.bf16.xpose.msra.mxu0 0
        %715 = vmatprep.subr.bf16.mxu0 0
        %716 = vmatpush1.bf16.xpose.msra.mxu0 0
        %717 = vmatprep.subr.bf16.mxu0 0
        %718 = vmatpush1.bf16.xpose.msra.mxu0 0
        %719 = vmatprep.subr.bf16.mxu0 0
        %720 = vmatpush1.bf16.xpose.msra.mxu0 0
        %721 = vmatprep.subr.bf16.mxu0 0
        %722 = vmatpush1.bf16.xpose.msra.mxu0 0
        %723 = vmatprep.subr.bf16.mxu0 0
        %724 = vmatpush1.bf16.xpose.msra.mxu0 0
        %725 = vmatprep.subr.bf16.mxu0 0
        %726 = vmatpush1.bf16.xpose.msra.mxu0 0
        %727 = vmatprep.subr.bf16.mxu0 0
        %728 = vmatpush1.bf16.xpose.msra.mxu0 0
        %729 = vmatprep.subr.bf16.mxu0 0
        %730 = vmatpush1.bf16.xpose.msra.mxu0 0
        %731 = vmatprep.subr.bf16.mxu0 0
        %732 = vmatpush1.bf16.xpose.msra.mxu0 0
        %733 = vmatprep.mubr.bf16.mxu0 0
        %734 = vmatmul.mubr.bf16.gmra.mrb[0].mxu0 %v696
        %v735 = vpop.f32.mrb[0].mxu0
        %v736 = vadd.f32 0.0, %v735
        %v737 = vpop.f32.mrb[0].mxu0
        %v738 = vpop.f32.mrb[0].mxu0
        %v739 = vadd.f32 0.0, %v738
        %v740 = vpop.f32.mrb[0].mxu0
        %741 = vdwg.mxu0
        %v742 = vsel %vm682, %v736, -1e+30
        %v743 = vsel %vm683, %v739, -1e+30
        %v744 = vsel %vm694, %v742, -inf
        %745 = vmax.xlane.f32.xlu0 %v744
        %v746 = vpop.xlane.xlu0 %745
        %v747 = vsel %vm694, %v743, -inf
        %748 = vmax.xlane.f32.xlu0 %v747
        %v749 = vpop.xlane.xlu0 %748
        %v750 = vsub.f32 %v742, %v746
        %v751 = vsub.f32 %v743, %v749
        %v752 = vmul.f32 %v750, 1.442695
        %v753 = vpow.pop %v752
        %v754 = vmul.f32 %v751, 1.442695
        %v755 = vpow.pop %v754
        %v756 = vsel %vm694, %v753, 0.0
        %757 = vadd.xlane.f32.xlu0 %v756
        %v758 = vpop.xlane.xlu0 %757
        %v759 = vsel %vm694, %v755, 0.0
        %760 = vadd.xlane.f32.xlu0 %v759
        %v761 = vpop.xlane.xlu0 %760
        %v762 = vrcp.pop %v758
        %v763 = vrcp.pop %v761
        %v764 = vpack.c.bf16 %v755, %v753
        %766 = vrot.lane.b32.xlu0 %v685, 80
        %v767 = vpop.permute.xlu0 %766
        %v769 = vsel %vm694, %v764, 0
        %vm771 = vcmask 1043456
        %v773 = vsel %vm771, %v767, 0
        %775 = vmatprep.subr.bf16.mxu0 0
        %776 = vmatpush1.bf16.msra.mxu0 %v773
        %777 = vmatprep.subr.bf16.mxu0 0
        %778 = vmatpush1.bf16.msra.mxu0 0
        %779 = vmatprep.subr.bf16.mxu0 0
        %780 = vmatpush1.bf16.msra.mxu0 0
        %781 = vmatprep.subr.bf16.mxu0 0
        %782 = vmatpush1.bf16.msra.mxu0 0
        %783 = vmatprep.subr.bf16.mxu0 0
        %784 = vmatpush1.bf16.msra.mxu0 0
        %785 = vmatprep.subr.bf16.mxu0 0
        %786 = vmatpush1.bf16.msra.mxu0 0
        %787 = vmatprep.subr.bf16.mxu0 0
        %788 = vmatpush1.bf16.msra.mxu0 0
        %789 = vmatprep.subr.bf16.mxu0 0
        %790 = vmatpush1.bf16.msra.mxu0 0
        %791 = vmatprep.subr.bf16.mxu0 0
        %792 = vmatpush1.bf16.msra.mxu0 0
        %793 = vmatprep.subr.bf16.mxu0 0
        %794 = vmatpush1.bf16.msra.mxu0 0
        %795 = vmatprep.subr.bf16.mxu0 0
        %796 = vmatpush1.bf16.msra.mxu0 0
        %797 = vmatprep.subr.bf16.mxu0 0
        %798 = vmatpush1.bf16.msra.mxu0 0
        %799 = vmatprep.subr.bf16.mxu0 0
        %800 = vmatpush1.bf16.msra.mxu0 0
        %801 = vmatprep.subr.bf16.mxu0 0
        %802 = vmatpush1.bf16.msra.mxu0 0
        %803 = vmatprep.subr.bf16.mxu0 0
        %804 = vmatpush1.bf16.msra.mxu0 0
        %805 = vmatprep.subr.bf16.mxu0 0
        %806 = vmatpush1.bf16.msra.mxu0 0
        %807 = vmatprep.mubr.bf16.mxu0 0
        %808 = vmatmul.mubr.bf16.gmra.mrb[0].mxu0 %v769
        %v809 = vpop.f32.mrb[0].mxu0
        %v810 = vadd.f32 0.0, %v809
        %v811 = vpop.f32.mrb[0].mxu0
        %v812 = vpop.f32.mrb[0].mxu0
        %v813 = vadd.f32 0.0, %v812
        %v814 = vpop.f32.mrb[0].mxu0
        %815 = vdwg.mxu0
        %v816 = vmul.f32 %v810, %v762
        %v817 = vmul.f32 %v813, %v763
        %818 = vst.msk [vmem:[#allocation3] sm:$0xff] %vm694, %v816
        %820 = vrot.lane.b32.xlu0 %v817, 8
        %v821 = vpop.permute.xlu0 %820
        %vm823 = vcmask 130112
        %824 = vst.msk [vmem:[#allocation3] sm:$0xff] %vm823, %v821
        %826 = vrot.lane.b32.xlu0 %v690, 112
        %v827 = vpop.permute.xlu0 %826
        %828 = vrot.lane.b32.xlu0 %v684, 88
        %v829 = vpop.permute.xlu0 %828
        %v831 = vsel %vm694, %v827, 0
        %v834 = vsel %vm694, %v829, 0
        %836 = vmatprep.subr.bf16.mxu0 0
        %837 = vmatpush1.bf16.xpose.msra.mxu0 %v834
        %838 = vmatprep.subr.bf16.mxu0 0
        %839 = vmatpush1.bf16.xpose.msra.mxu0 0
        %840 = vmatprep.subr.bf16.mxu0 0
        %841 = vmatpush1.bf16.xpose.msra.mxu0 0
        %842 = vmatprep.subr.bf16.mxu0 0
        %843 = vmatpush1.bf16.xpose.msra.mxu0 0
        %844 = vmatprep.subr.bf16.mxu0 0
        %845 = vmatpush1.bf16.xpose.msra.mxu0 0
        %846 = vmatprep.subr.bf16.mxu0 0
        %847 = vmatpush1.bf16.xpose.msra.mxu0 0
        %848 = vmatprep.subr.bf16.mxu0 0
        %849 = vmatpush1.bf16.xpose.msra.mxu0 0
        %850 = vmatprep.subr.bf16.mxu0 0
        %851 = vmatpush1.bf16.xpose.msra.mxu0 0
        %852 = vmatprep.subr.bf16.mxu0 0
        %853 = vmatpush1.bf16.xpose.msra.mxu0 0
        %854 = vmatprep.subr.bf16.mxu0 0
        %855 = vmatpush1.bf16.xpose.msra.mxu0 0
        %856 = vmatprep.subr.bf16.mxu0 0
        %857 = vmatpush1.bf16.xpose.msra.mxu0 0
        %858 = vmatprep.subr.bf16.mxu0 0
        %859 = vmatpush1.bf16.xpose.msra.mxu0 0
        %860 = vmatprep.subr.bf16.mxu0 0
        %861 = vmatpush1.bf16.xpose.msra.mxu0 0
        %862 = vmatprep.subr.bf16.mxu0 0
        %863 = vmatpush1.bf16.xpose.msra.mxu0 0
        %864 = vmatprep.subr.bf16.mxu0 0
        %865 = vmatpush1.bf16.xpose.msra.mxu0 0
        %866 = vmatprep.subr.bf16.mxu0 0
        %867 = vmatpush1.bf16.xpose.msra.mxu0 0
        %868 = vmatprep.mubr.bf16.mxu0 0
        %869 = vmatmul.mubr.bf16.gmra.mrb[0].mxu0 %v831
        %v870 = vpop.f32.mrb[0].mxu0
        %v871 = vadd.f32 0.0, %v870
        %v872 = vpop.f32.mrb[0].mxu0
        %v873 = vpop.f32.mrb[0].mxu0
        %v874 = vadd.f32 0.0, %v873
        %v875 = vpop.f32.mrb[0].mxu0
        %876 = vdwg.mxu0
        %v877 = vsel %vm682, %v871, -1e+30
        %v878 = vsel %vm683, %v874, -1e+30
        %v879 = vsel %vm694, %v877, -inf
        %880 = vmax.xlane.f32.xlu0 %v879
        %v881 = vpop.xlane.xlu0 %880
        %v882 = vsel %vm694, %v878, -inf
        %883 = vmax.xlane.f32.xlu0 %v882
        %v884 = vpop.xlane.xlu0 %883
        %v885 = vsub.f32 %v877, %v881
        %v886 = vsub.f32 %v878, %v884
        %v887 = vmul.f32 %v885, 1.442695
        %v888 = vpow.pop %v887
        %v889 = vmul.f32 %v886, 1.442695
        %v890 = vpow.pop %v889
        %v891 = vsel %vm694, %v888, 0.0
        %892 = vadd.xlane.f32.xlu0 %v891
        %v893 = vpop.xlane.xlu0 %892
        %v894 = vsel %vm694, %v890, 0.0
        %895 = vadd.xlane.f32.xlu0 %v894
        %v896 = vpop.xlane.xlu0 %895
        %v897 = vrcp.pop %v893
        %v898 = vrcp.pop %v896
        %v899 = vpack.c.bf16 %v890, %v888
        %900 = vrot.lane.b32.xlu0 %v685, 72
        %v901 = vpop.permute.xlu0 %900
        %v903 = vsel %vm694, %v899, 0
        %v906 = vsel %vm771, %v901, 0
        %908 = vmatprep.subr.bf16.mxu0 0
        %909 = vmatpush1.bf16.msra.mxu0 %v906
        %910 = vmatprep.subr.bf16.mxu0 0
        %911 = vmatpush1.bf16.msra.mxu0 0
        %912 = vmatprep.subr.bf16.mxu0 0
        %913 = vmatpush1.bf16.msra.mxu0 0
        %914 = vmatprep.subr.bf16.mxu0 0
        %915 = vmatpush1.bf16.msra.mxu0 0
        %916 = vmatprep.subr.bf16.mxu0 0
        %917 = vmatpush1.bf16.msra.mxu0 0
        %918 = vmatprep.subr.bf16.mxu0 0
        %919 = vmatpush1.bf16.msra.mxu0 0
        %920 = vmatprep.subr.bf16.mxu0 0
        %921 = vmatpush1.bf16.msra.mxu0 0
        %922 = vmatprep.subr.bf16.mxu0 0
        %923 = vmatpush1.bf16.msra.mxu0 0
        %924 = vmatprep.subr.bf16.mxu0 0
        %925 = vmatpush1.bf16.msra.mxu0 0
        %926 = vmatprep.subr.bf16.mxu0 0
        %927 = vmatpush1.bf16.msra.mxu0 0
        %928 = vmatprep.subr.bf16.mxu0 0
        %929 = vmatpush1.bf16.msra.mxu0 0
        %930 = vmatprep.subr.bf16.mxu0 0
        %931 = vmatpush1.bf16.msra.mxu0 0
        %932 = vmatprep.subr.bf16.mxu0 0
        %933 = vmatpush1.bf16.msra.mxu0 0
        %934 = vmatprep.subr.bf16.mxu0 0
        %935 = vmatpush1.bf16.msra.mxu0 0
        %936 = vmatprep.subr.bf16.mxu0 0
        %937 = vmatpush1.bf16.msra.mxu0 0
        %938 = vmatprep.subr.bf16.mxu0 0
        %939 = vmatpush1.bf16.msra.mxu0 0
        %940 = vmatprep.mubr.bf16.mxu0 0
        %941 = vmatmul.mubr.bf16.gmra.mrb[0].mxu0 %v903
        %v942 = vpop.f32.mrb[0].mxu0
        %v943 = vadd.f32 0.0, %v942
        %v944 = vpop.f32.mrb[0].mxu0
        %v945 = vpop.f32.mrb[0].mxu0
        %v946 = vadd.f32 0.0, %v945
        %v947 = vpop.f32.mrb[0].mxu0
        %948 = vdwg.mxu0
        %v949 = vmul.f32 %v943, %v897
        %v950 = vmul.f32 %v946, %v898
        %952 = vrot.lane.b32.xlu0 %v949, 16
        %v953 = vpop.permute.xlu0 %952
        %vm955 = vcmask 195712
        %956 = vst.msk [vmem:[#allocation3] sm:$0xff] %vm955, %v953
        %958 = vrot.lane.b32.xlu0 %v950, 24
        %v959 = vpop.permute.xlu0 %958
        %vm961 = vcmask 261312
        %962 = vst.msk [vmem:[#allocation3] sm:$0xff] %vm961, %v959
        %v963 = vld [vmem:[#allocation3] sm:$0xff]
        %v964 = vpack.c.bf16 %v963, %v963
        %v965 = vld [vmem:[%s515] sm:$0xf]
        %v966 = vld [vmem:[%s515 + $0x4] sm:$0xf]
        %v967 = vld [vmem:[%s515 + $0x8] sm:$0xf]
        %v968 = vld [vmem:[%s515 + $0xc] sm:$0xf]
        %v973 = vunpack.c.l.b16 %v965
        %v974 = vunpack.c.l.b16 %v966
        %v975 = vunpack.c.l.b16 %v967
        %v976 = vunpack.c.l.b16 %v968
        %v977 = vpack.c.b16 %v974, %v973
        %v978 = vpack.c.b16 %v976, %v975
        %v982 = vsel %vm540, %v964, 0
        %984 = vmatprep.subr.bf16.mxu0 0
        %985 = vmatpush1.bf16.msra.mxu0 %v977
        %986 = vmatprep.subr.bf16.mxu0 0
        %987 = vmatpush1.bf16.msra.mxu0 %v978
        %988 = vmatprep.subr.bf16.mxu0 0
        %989 = vmatpush1.bf16.msra.mxu0 0
        %990 = vmatprep.subr.bf16.mxu0 0
        %991 = vmatpush1.bf16.msra.mxu0 0
        %992 = vmatprep.subr.bf16.mxu0 0
        %993 = vmatpush1.bf16.msra.mxu0 0
        %994 = vmatprep.subr.bf16.mxu0 0
        %995 = vmatpush1.bf16.msra.mxu0 0
        %996 = vmatprep.subr.bf16.mxu0 0
        %997 = vmatpush1.bf16.msra.mxu0 0
        %998 = vmatprep.subr.bf16.mxu0 0
        %999 = vmatpush1.bf16.msra.mxu0 0
        %1000 = vmatprep.subr.bf16.mxu0 0
        %1001 = vmatpush1.bf16.msra.mxu0 0
        %1002 = vmatprep.subr.bf16.mxu0 0
        %1003 = vmatpush1.bf16.msra.mxu0 0
        %1004 = vmatprep.subr.bf16.mxu0 0
        %1005 = vmatpush1.bf16.msra.mxu0 0
        %1006 = vmatprep.subr.bf16.mxu0 0
        %1007 = vmatpush1.bf16.msra.mxu0 0
        %1008 = vmatprep.subr.bf16.mxu0 0
        %1009 = vmatpush1.bf16.msra.mxu0 0
        %1010 = vmatprep.subr.bf16.mxu0 0
        %1011 = vmatpush1.bf16.msra.mxu0 0
        %1012 = vmatprep.subr.bf16.mxu0 0
        %1013 = vmatpush1.bf16.msra.mxu0 0
        %1014 = vmatprep.subr.bf16.mxu0 0
        %1015 = vmatpush1.bf16.msra.mxu0 0
        %1016 = vmatprep.mubr.bf16.mxu0 0
        %1017 = vmatmul.mubr.bf16.gmra.mrb[0].mxu0 %v982
        %v1018 = vpop.f32.mrb[0].mxu0
        %v1019 = vadd.f32 0.0, %v1018
        %v1020 = vpop.f32.mrb[0].mxu0
        %v1021 = vpop.f32.mrb[0].mxu0
        %v1022 = vpop.f32.mrb[0].mxu0
        %1023 = vdwg.mxu0
        %v1024 = vadd.f32 %v537, %v1019
        %v1025 = vld [vmem:[%s518] sm:$0x1]
        %v1026 = vmul.f32 %v1024, %v1024
        %v1027 = vsel %vm540, %v1026, 0.0
        %1028 = vadd.xlane.f32.xlu0 %v1027
        %v1029 = vpop.xlane.xlu0 %1028
        %v1030 = vmul.f32 %v1029, %v544
        %v1031 = vadd.f32 %v1030, 1e-05
        %v1032 = vrsqrt.pop %v1031
        %v1033 = vmul.f32 %v1024, %v1032
        %v1035 = vlaneseq
        %v1036 = vshrl.u32 %v1035, 7
        %v1037 = vsub.s32 0, %v1036
        %v1038 = vrot.slane %v1025, %v1037
        %v1040 = vmul.f32 %v1033, %v1038
        %v1041 = vpack.c.bf16 %v1040, %v1040
        %v1042 = vld [vmem:[%s523] sm:$0xf]
        %v1043 = vld [vmem:[%s523 + $0x4] sm:$0xf]
        %v1044 = vld [vmem:[%s523 + $0x8] sm:$0xf]
        %v1045 = vld [vmem:[%s523 + $0xc] sm:$0xf]
        %v1050 = vunpack.c.l.b16 %v1042
        %v1051 = vunpack.c.l.b16 %v1043
        %v1052 = vunpack.c.l.b16 %v1044
        %v1053 = vunpack.c.l.b16 %v1045
        %v1054 = vpack.c.b16 %v1051, %v1050
        %v1055 = vpack.c.b16 %v1053, %v1052
        %v1059 = vsel %vm540, %v1041, 0
        %1061 = vmatprep.subr.bf16.mxu0 0
        %1062 = vmatpush1.bf16.msra.mxu0 %v1054
        %1063 = vmatprep.subr.bf16.mxu0 0
        %1064 = vmatpush1.bf16.msra.mxu0 %v1055
        %1065 = vmatprep.subr.bf16.mxu0 0
        %1066 = vmatpush1.bf16.msra.mxu0 0
        %1067 = vmatprep.subr.bf16.mxu0 0
        %1068 = vmatpush1.bf16.msra.mxu0 0
        %1069 = vmatprep.subr.bf16.mxu0 0
        %1070 = vmatpush1.bf16.msra.mxu0 0
        %1071 = vmatprep.subr.bf16.mxu0 0
        %1072 = vmatpush1.bf16.msra.mxu0 0
        %1073 = vmatprep.subr.bf16.mxu0 0
        %1074 = vmatpush1.bf16.msra.mxu0 0
        %1075 = vmatprep.subr.bf16.mxu0 0
        %1076 = vmatpush1.bf16.msra.mxu0 0
        %1077 = vmatprep.subr.bf16.mxu0 0
        %1078 = vmatpush1.bf16.msra.mxu0 0
        %1079 = vmatprep.subr.bf16.mxu0 0
        %1080 = vmatpush1.bf16.msra.mxu0 0
        %1081 = vmatprep.subr.bf16.mxu0 0
        %1082 = vmatpush1.bf16.msra.mxu0 0
        %1083 = vmatprep.subr.bf16.mxu0 0
        %1084 = vmatpush1.bf16.msra.mxu0 0
        %1085 = vmatprep.subr.bf16.mxu0 0
        %1086 = vmatpush1.bf16.msra.mxu0 0
        %1087 = vmatprep.subr.bf16.mxu0 0
        %1088 = vmatpush1.bf16.msra.mxu0 0
        %1089 = vmatprep.subr.bf16.mxu0 0
        %1090 = vmatpush1.bf16.msra.mxu0 0
        %1091 = vmatprep.subr.bf16.mxu0 0
        %1092 = vmatpush1.bf16.msra.mxu0 0
        %1093 = vmatprep.mubr.bf16.mxu0 0
        %1094 = vmatmul.mubr.bf16.gmra.mrb[0].mxu0 %v1059
        %v1095 = vpop.f32.mrb[0].mxu0
        %v1096 = vadd.f32 0.0, %v1095
        %v1097 = vpop.f32.mrb[0].mxu0
        %v1098 = vpop.f32.mrb[0].mxu0
        %v1099 = vpop.f32.mrb[0].mxu0
        %1100 = vdwg.mxu0
        %v1101 = vsub.f32 0.0, %v1096
        %v1102 = vmul.f32 %v1101, 1.442695
        %v1103 = vpow.pop %v1102
        %v1104 = vadd.f32 %v1103, 1.0
        %v1105 = vrcp.pop %v1104
        %v1106 = vmul.f32 1.0, %v1105
        %v1107 = vmul.f32 %v1096, %v1106
        %1109 = vrot.lane.b32.xlu0 %v1096, 64
        %v1110 = vpop.permute.xlu0 %1109
        %v1112 = vmul.f32 %v1107, %v1110
        %v1113 = vpack.c.bf16 %v1112, %v1112
        %v1114 = vld [vmem:[%s528] sm:$0xf]
        %v1115 = vld [vmem:[%s528 + $0x4] sm:$0xf]
        %v1116 = vld [vmem:[%s528 + $0x8] sm:$0xf]
        %v1117 = vld [vmem:[%s528 + $0xc] sm:$0xf]
        %v1118 = vld [vmem:[%s528 + $0x10] sm:$0xf]
        %v1119 = vld [vmem:[%s528 + $0x14] sm:$0xf]
        %v1120 = vld [vmem:[%s528 + $0x18] sm:$0xf]
        %v1121 = vld [vmem:[%s528 + $0x1c] sm:$0xf]
        %v1130 = vunpack.c.l.b16 %v1114
        %v1131 = vunpack.c.l.b16 %v1115
        %v1132 = vunpack.c.l.b16 %v1116
        %v1133 = vunpack.c.l.b16 %v1117
        %v1134 = vunpack.c.l.b16 %v1118
        %v1135 = vunpack.c.l.b16 %v1119
        %v1136 = vunpack.c.l.b16 %v1120
        %v1137 = vunpack.c.l.b16 %v1121
        %v1138 = vpack.c.b16 %v1131, %v1130
        %v1139 = vpack.c.b16 %v1133, %v1132
        %v1140 = vpack.c.b16 %v1135, %v1134
        %v1141 = vpack.c.b16 %v1137, %v1136
        %vm1146 = vcmask 523264
        %v1148 = vsel %vm1146, %v1113, 0
        %1150 = vmatprep.subr.bf16.mxu0 0
        %1151 = vmatpush1.bf16.msra.mxu0 %v1138
        %1152 = vmatprep.subr.bf16.mxu0 0
        %1153 = vmatpush1.bf16.msra.mxu0 %v1139
        %1154 = vmatprep.subr.bf16.mxu0 0
        %1155 = vmatpush1.bf16.msra.mxu0 %v1140
        %1156 = vmatprep.subr.bf16.mxu0 0
        %1157 = vmatpush1.bf16.msra.mxu0 %v1141
        %1158 = vmatprep.subr.bf16.mxu0 0
        %1159 = vmatpush1.bf16.msra.mxu0 0
        %1160 = vmatprep.subr.bf16.mxu0 0
        %1161 = vmatpush1.bf16.msra.mxu0 0
        %1162 = vmatprep.subr.bf16.mxu0 0
        %1163 = vmatpush1.bf16.msra.mxu0 0
        %1164 = vmatprep.subr.bf16.mxu0 0
        %1165 = vmatpush1.bf16.msra.mxu0 0
        %1166 = vmatprep.subr.bf16.mxu0 0
        %1167 = vmatpush1.bf16.msra.mxu0 0
        %1168 = vmatprep.subr.bf16.mxu0 0
        %1169 = vmatpush1.bf16.msra.mxu0 0
        %1170 = vmatprep.subr.bf16.mxu0 0
        %1171 = vmatpush1.bf16.msra.mxu0 0
        %1172 = vmatprep.subr.bf16.mxu0 0
        %1173 = vmatpush1.bf16.msra.mxu0 0
        %1174 = vmatprep.subr.bf16.mxu0 0
        %1175 = vmatpush1.bf16.msra.mxu0 0
        %1176 = vmatprep.subr.bf16.mxu0 0
        %1177 = vmatpush1.bf16.msra.mxu0 0
        %1178 = vmatprep.subr.bf16.mxu0 0
        %1179 = vmatpush1.bf16.msra.mxu0 0
        %1180 = vmatprep.subr.bf16.mxu0 0
        %1181 = vmatpush1.bf16.msra.mxu0 0
        %1182 = vmatprep.mubr.bf16.mxu0 0
        %1183 = vmatmul.mubr.bf16.gmra.mrb[0].mxu0 %v1148
        %v1184 = vpop.f32.mrb[0].mxu0
        %v1185 = vadd.f32 0.0, %v1184
        %v1186 = vpop.f32.mrb[0].mxu0
        %v1187 = vpop.f32.mrb[0].mxu0
        %v1188 = vpop.f32.mrb[0].mxu0
        %1189 = vdwg.mxu0
        %v1190 = vadd.f32 %v1024, %v1185
        %1191 = vst.msk [vmem:[#allocation2] sm:$0xff] %vm540, %v1190
        %1192 = vst.msk [vmem:[#allocation4] sm:$0xff] %vm540, %v1190
        %p1193 = scmp.eq.s32.totalorder %s25, 1
        // Predicated region
        $region77: #{glm_forward_pallas.1} parent=71 // pred_check
          %p1194 = pneg %p1193
        $region78: #{glm_forward_pallas.1} parent=71 // pred_check_branch
          %1196 = sbr.rel (%p1194) target = $region80
        $region79: #{glm_forward_pallas.1} parent=71 // pred_region
          %v1197 = vld [vmem:[%s12] sm:$0x1]
          %v1198 = vmul.f32 %v1190, %v1190
          %v1199 = vsel %vm540, %v1198, 0.0
          %1200 = vadd.xlane.f32.xlu0 %v1199
          %v1201 = vpop.xlane.xlu0 %1200
          %v1202 = vmul.f32 %v1201, %v544
          %v1203 = vadd.f32 %v1202, 1e-05
          %v1204 = vrsqrt.pop %v1203
          %v1205 = vmul.f32 %v1190, %v1204
          %v1207 = vlaneseq
          %v1208 = vshrl.u32 %v1207, 7
          %v1209 = vsub.s32 0, %v1208
          %v1210 = vrot.slane %v1197, %v1209
          %v1212 = vmul.f32 %v1205, %v1210
          %1213 = vst.msk [vmem:[#allocation4] sm:$0xff] %vm540, %v1212
        $region80: #{glm_forward_pallas.1} parent=71 // pred_fallthru
          _
        // Predicated region
        $region81: #{glm_forward_pallas.1} parent=71 // pred_check
          %p1214 = pneg %p346
        $region82: #{glm_forward_pallas.1} parent=71 // pred_check_branch
          %1216 = sbr.rel (%p1214) target = $region84
        $region83: #{glm_forward_pallas.1} parent=71 // pred_region
          %s1218 = ssub.s32 128, 128
          %1219 = vsyncadd [#allocation5], %s1218
          %s1221 = sshll.u32 [#allocation4], 4
          %s1222 = int_to_ptr.vmem [resolvable:$true] %s1221
          %1224 = dma.vmem_to_hbm [thread:$0]  %s1222, 128, %s13, [#allocation5]
        $region84: #{glm_forward_pallas.1} parent=71 // pred_fallthru
          _
        // Predicated region
        $region85: #{glm_forward_pallas.1} parent=71 // pred_check
          %p1225 = pneg %p346
        $region86: #{glm_forward_pallas.1} parent=71 // pred_check_branch
          %1227 = sbr.rel (%p1225) target = $region88
        $region87: #{glm_forward_pallas.1} parent=71 // pred_region
          %1228 = dma.done [#allocation5], 128
        $region88: #{glm_forward_pallas.1} parent=71 // pred_fallthru
          _
      $region72: #{glm_forward_pallas.1} parent=5 // pred_fallthru
        _
      %p1229 = scmp.le.s32.totalorder 2, %s20
      // Predicated region
      $region89: #{glm_forward_pallas.1} parent=5 // pred_check
        %p1230 = pneg %p1229
      $region90: #{glm_forward_pallas.1} parent=5 // pred_check_branch
        %1232 = sbr.rel (%p1230) target = $region92
      $region91: #{glm_forward_pallas.1} parent=5 // pred_region
        %s1233 = ssub.s32 %s20, 2
      $region92: #{glm_forward_pallas.1} parent=5 // pred_fallthru
        _
    $region6: #{glm_forward_pallas.1} parent=1 // loop_footer
      %s24 = sadd.s32 1, %s20
    $region7: #{glm_forward_pallas.1} parent=1 // loop_footer_branch
      %19 = sbr.rel target = $region3
    $region8: #{glm_forward_pallas.1} parent=1 // loop_exit
      _
    %1234 = vsyncpa [#allocation5], 1
    %s1235 = scalar_lea.sflag [#allocation5], 1
    %1236 = vsyncpa %s1235, 1

</llo_original>
